<compile_context>
chip_gen: v6e
topology: v6e:2x2x1
jax: 0.10.0
libtpu: 0.0.40
codegen_flags: <defaults>
</compile_context>

<pallas_src>
import functools

import jax
import jax.numpy as jnp
from jax.experimental import pallas as pl
from jax.experimental.pallas import tpu as pltpu

EPS = 1e-5
CP = 128                        # channel (lane) padding target: lane-dense output
VMEM_LIMIT = 32 * 1024 * 1024   # explicit, portable across v5e/v6e/v7x


def _round_up(x, m):
    return (x + m - 1) // m * m


# ---------------------------------------------------------------------------
# Pallas kernels
# ---------------------------------------------------------------------------
def _conv_stats_kernel(m_real, tm, a_ref, w_ref, b_ref, y_ref, s_ref):
    """y_tile = a_tile @ W + b (bf16 in, f32 acc); also emits per-tile
    partial BN statistics: row 0 = sum(y), row 1 = sum(y*y) per channel."""
    y = jnp.dot(a_ref[...], w_ref[...],
                preferred_element_type=jnp.float32) + b_ref[...]

    # Mask rows that are only M-padding so they don't pollute the statistics.
    i = pl.program_id(0)
    row = jax.lax.broadcasted_iota(jnp.int32, y.shape, 0) + i * tm
    yv = jnp.where(row < m_real, y, 0.0)

    ssum = jnp.sum(yv, axis=0, keepdims=True)             # (1, CP)
    ssq = jnp.sum(yv * yv, axis=0, keepdims=True)         # (1, CP)
    pad = jnp.zeros((6, s_ref.shape[1]), jnp.float32)
    s_ref[...] = jnp.concatenate([ssum, ssq, pad], axis=0)  # (8, CP)

    y_ref[...] = y.astype(y_ref.dtype)                    # bf16 intermediate


def _bn_sigmoid_kernel(y_ref, sc_ref, sh_ref, o_ref):
    """o = sigmoid(y * scale + shift) * 0.3  (scale/shift fold mean/var/γ/β)."""
    yn = y_ref[...].astype(jnp.float32) * sc_ref[...] + sh_ref[...]
    o_ref[...] = 0.3 * pl.reciprocal(1.0 + jnp.exp(-yn), approx=True)


# ---------------------------------------------------------------------------
# pallas_call wrappers
# ---------------------------------------------------------------------------
def conv_bias_stats(a, w, b, m_real, tm, nm):
    m_pad, k = a.shape
    cp = w.shape[1]
    kernel = functools.partial(_conv_stats_kernel, m_real, tm)
    cost = pl.CostEstimate(
        flops=2 * m_pad * k * cp,
        transcendentals=0,
        bytes_accessed=a.size * 2 + w.size * 2 + b.size * 4
        + m_pad * cp * 2 + nm * 8 * cp * 4)
    return pl.pallas_call(
        kernel,
        out_shape=(jax.ShapeDtypeStruct((m_pad, cp), jnp.bfloat16),
                   jax.ShapeDtypeStruct((nm * 8, cp), jnp.float32)),
        grid=(nm,),
        in_specs=[pl.BlockSpec((tm, k), lambda i: (i, 0)),
                  pl.BlockSpec((k, cp), lambda i: (0, 0)),
                  pl.BlockSpec((1, cp), lambda i: (0, 0))],
        out_specs=(pl.BlockSpec((tm, cp), lambda i: (i, 0)),
                   pl.BlockSpec((8, cp), lambda i: (i, 0))),
        compiler_params=pltpu.CompilerParams(
            dimension_semantics=("parallel",),
            vmem_limit_bytes=VMEM_LIMIT),
        cost_estimate=cost,
    )(a, w, b)


def bn_sigmoid(y, scale, shift, tm, nm):
    m_pad, cp = y.shape
    cost = pl.CostEstimate(
        flops=4 * m_pad * cp,
        transcendentals=m_pad * cp,
        bytes_accessed=y.size * 2 + m_pad * cp * 4 + 2 * cp * 4)
    return pl.pallas_call(
        _bn_sigmoid_kernel,
        out_shape=jax.ShapeDtypeStruct((m_pad, cp), jnp.float32),
        grid=(nm,),
        in_specs=[pl.BlockSpec((tm, cp), lambda i: (i, 0)),
                  pl.BlockSpec((1, cp), lambda i: (0, 0)),
                  pl.BlockSpec((1, cp), lambda i: (0, 0))],
        out_specs=pl.BlockSpec((tm, cp), lambda i: (i, 0)),
        compiler_params=pltpu.CompilerParams(
            dimension_semantics=("parallel",),
            vmem_limit_bytes=VMEM_LIMIT),
        cost_estimate=cost,
    )(y, scale, shift)


# ---------------------------------------------------------------------------
# Glue (pure JAX): padding, im2col patch extraction, layout shuffles
# ---------------------------------------------------------------------------
def im2col(x_nhwc, kh, kw, stride, padding):
    if padding > 0:
        x_nhwc = jnp.pad(
            x_nhwc, ((0, 0), (padding, padding), (padding, padding), (0, 0)))
    N, Hp, Wp, C = x_nhwc.shape
    Ho = (Hp - kh) // stride + 1
    Wo = (Wp - kw) // stride + 1
    cols = []
    for i in range(kh):
        for j in range(kw):
            cols.append(
                x_nhwc[:, i:i + stride * Ho:stride, j:j + stride * Wo:stride, :])
    cols = jnp.concatenate(cols, axis=-1)              # (N, Ho, Wo, kh*kw*C)
    return cols.reshape(N * Ho * Wo, kh * kw * C), (N, Ho, Wo)


@jax.jit
def get_disparity_forward(x_nchw, w_hwio, b, gamma, beta):
    """Pallas implementation of get_disparity.forward (NCHW in / NCHW out)."""
    N, Cin, H, W = x_nchw.shape
    Cout = w_hwio.shape[-1]

    x = jnp.transpose(x_nchw, (0, 2, 3, 1)).astype(jnp.bfloat16)   # -> NHWC
    a, (n, ho, wo) = im2col(x, 3, 3, 1, 1)             # (M, 9*Cin) bf16
    M, K = a.shape

    # Tile the M axis (biggest tile that comfortably fits VMEM wins);
    # pad channels to a lane-dense 128.
    TM = min(512, _round_up(M, 8))
    M_pad = _round_up(M, TM)
    nm = M_pad // TM
    a = jnp.pad(a, ((0, M_pad - M), (0, 0)))

    w = jnp.pad(w_hwio.reshape(K, Cout).astype(jnp.bfloat16),
                ((0, 0), (0, CP - Cout)))
    bp = jnp.pad(b.reshape(1, Cout).astype(jnp.float32),
                 ((0, 0), (0, CP - Cout)))
    gp = jnp.pad(gamma.reshape(1, Cout).astype(jnp.float32),
                 ((0, 0), (0, CP - Cout)))
    betap = jnp.pad(beta.reshape(1, Cout).astype(jnp.float32),
                    ((0, 0), (0, CP - Cout)))

    # Pass 1: conv (matmul+bias) + per-tile partial BN statistics.
    y, stats = conv_bias_stats(a, w, bp, M, TM, nm)

    # Tiny reduction of the per-tile partials -> training-mode BN params.
    st = stats.reshape(nm, 8, CP)
    ssum = jnp.sum(st[:, 0, :], axis=0)
    ssq = jnp.sum(st[:, 1, :], axis=0)
    mean = ssum / M
    var = jnp.maximum(ssq / M - mean * mean, 0.0)      # biased variance
    scale = gp[0] * jax.lax.rsqrt(var + EPS)
    shift = betap[0] - mean * scale

    # Pass 2: normalize + sigmoid * 0.3 (lane-dense tiled stores).
    out = bn_sigmoid(y, scale.reshape(1, CP), shift.reshape(1, CP), TM, nm)

    out = out[:M, :Cout].reshape(n, ho, wo, Cout)
    return jnp.transpose(out, (0, 3, 1, 2))            # NHWC -> NCHW


# ---------------------------------------------------------------------------
# Pure-JAX reference (sanity check), same math with lax.conv in f32/HIGHEST
# ---------------------------------------------------------------------------
def get_disparity_reference(x_nchw, w_hwio, b, gamma, beta):
    y = jax.lax.conv_general_dilated(
        x_nchw, w_hwio, window_strides=(1, 1), padding=[(1, 1), (1, 1)],
        dimension_numbers=("NCHW", "HWIO", "NCHW"),
        precision=jax.lax.Precision.HIGHEST)
    y = y + b.reshape(1, -1, 1, 1)
    mean = jnp.mean(y, axis=(0, 2, 3), keepdims=True)
    var = jnp.mean(jnp.square(y - mean), axis=(0, 2, 3), keepdims=True)
    yn = (y - mean) * jax.lax.rsqrt(var + EPS)
    yn = yn * gamma.reshape(1, -1, 1, 1) + beta.reshape(1, -1, 1, 1)
    return jax.nn.sigmoid(yn) * 0.3


# ---------------------------------------------------------------------------
if __name__ == "__main__":
    N, Cin, H, W = 2, 4, 16, 16
    Cout = 2                      # fixed by the module (Conv2d(in_channels, 2))

    key = jax.random.PRNGKey(0)
    kx, kw, kb = jax.random.split(key, 3)

    x = jax.random.normal(kx, (N, Cin, H, W), dtype=jnp.float32)
    # Conv weight in HWIO, BN affine at PyTorch defaults (gamma=1, beta=0).
    w = 0.1 * jax.random.normal(kw, (3, 3, Cin, Cout), jnp.float32)
    b = 0.1 * jax.random.normal(kb, (Cout,), jnp.float32)
    gamma = jnp.ones((Cout,), jnp.float32)
    beta = jnp.zeros((Cout,), jnp.float32)

    out = jax.block_until_ready(get_disparity_forward(x, w, b, gamma, beta))
    assert out.shape == (N, Cout, H, W), out.shape

    ref = jax.block_until_ready(get_disparity_reference(x, w, b, gamma, beta))
    # Tolerance budget: bf16 matmul inputs / bf16 y intermediate give
    # |Δ yn| ~ 1e-2 worst-case on the normalized scale -> <= 0.075 * 1e-2
    # ≈ 8e-4 after sigmoid*0.3; EUP approx reciprocal adds < 1e-4.
    err = float(jnp.max(jnp.abs(out - ref)))
    assert jnp.allclose(out, ref, atol=5e-3, rtol=1e-3), err

    print("KERNEL_OK")
</pallas_src>

<mosaic_0001>
module attributes {stable_mosaic.version = 11 : i64} {
  func.func @_conv_stats_kernel(%arg0: i32, %arg1: memref<512x36xbf16, #tpu.memory_space<vmem>>, %arg2: memref<36x128xbf16, #tpu.memory_space<vmem>>, %arg3: memref<1x128xf32, #tpu.memory_space<vmem>>, %arg4: memref<512x128xbf16, #tpu.memory_space<vmem>>, %arg5: memref<8x128xf32, #tpu.memory_space<vmem>>) attributes {dimension_semantics = [#tpu.dimension_semantics<parallel>], iteration_bounds = array<i64: 1>, scalar_prefetch = 0 : i64, scratch_operands = 0 : i64, tpu.core_type = #tpu.core_type<tc>, window_params = [{transform_indices = @transform_0, window_bounds = array<i64: 512, 36>}, {pipeline_mode = #tpu.pipeline_mode<synchronous>, transform_indices = @transform_1, window_bounds = array<i64: 36, 128>}, {pipeline_mode = #tpu.pipeline_mode<synchronous>, transform_indices = @transform_2, window_bounds = array<i64: 1, 128>}, {transform_indices = @transform_3, window_bounds = array<i64: 512, 128>}, {transform_indices = @transform_4, window_bounds = array<i64: 8, 128>}]} {
    %c0 = arith.constant 0 : index
    %c0_0 = arith.constant 0 : index
    %0 = vector.load %arg1[%c0, %c0_0] : memref<512x36xbf16, #tpu.memory_space<vmem>>, vector<512x36xbf16>
    %c0_1 = arith.constant 0 : index
    %c0_2 = arith.constant 0 : index
    %1 = vector.load %arg2[%c0_1, %c0_2] : memref<36x128xbf16, #tpu.memory_space<vmem>>, vector<36x128xbf16>
    %cst = arith.constant dense<0.000000e+00> : vector<512x128xf32>
    %2 = tpu.matmul %0, %1, %cst {dimension_numbers = #tpu.dot_dimension_numbers<[1], [0], [0], [1], [0, 0, 1, 1], [], []>} : vector<512x36xbf16>, vector<36x128xbf16>, vector<512x128xf32> -> vector<512x128xf32>
    %c0_3 = arith.constant 0 : index
    %c0_4 = arith.constant 0 : index
    %3 = vector.load %arg3[%c0_3, %c0_4] : memref<1x128xf32, #tpu.memory_space<vmem>>, vector<1x128xf32>
    %4 = vector.broadcast %3 : vector<1x128xf32> to vector<512x128xf32>
    %5 = arith.addf %2, %4 : vector<512x128xf32>
    %6 = tpu.iota {dimensions = array<i32: 0>} : vector<512x128xi32>
    %c512_i32 = arith.constant 512 : i32
    %7 = arith.muli %arg0, %c512_i32 : i32
    %8 = vector.broadcast %7 : i32 to vector<512x128xi32>
    %9 = arith.addi %6, %8 : vector<512x128xi32>
    %c512_i32_5 = arith.constant 512 : i32
    %10 = vector.broadcast %c512_i32_5 : i32 to vector<512x128xi32>
    %11 = arith.cmpi slt, %9, %10 : vector<512x128xi32>
    %cst_6 = arith.constant 0.000000e+00 : f32
    %12 = vector.broadcast %cst_6 : f32 to vector<512x128xf32>
    %13 = arith.select %11, %5, %12 : vector<512x128xi1>, vector<512x128xf32>
    %cst_7 = arith.constant dense<0.000000e+00> : vector<128xf32>
    %14 = vector.multi_reduction <add>, %13, %cst_7 [0] : vector<512x128xf32> to vector<128xf32>
    %15 = vector.shape_cast %14 : vector<128xf32> to vector<1x128xf32>
    %16 = arith.mulf %13, %13 : vector<512x128xf32>
    %cst_8 = arith.constant dense<0.000000e+00> : vector<128xf32>
    %17 = vector.multi_reduction <add>, %16, %cst_8 [0] : vector<512x128xf32> to vector<128xf32>
    %18 = vector.shape_cast %17 : vector<128xf32> to vector<1x128xf32>
    %cst_9 = arith.constant 0.000000e+00 : f32
    %19 = vector.broadcast %cst_9 : f32 to vector<6x128xf32>
    %20 = tpu.concatenate %15, %18, %19 in 0 : vector<1x128xf32>, vector<1x128xf32>, vector<6x128xf32> -> vector<8x128xf32>
    %c0_10 = arith.constant 0 : index
    %c0_11 = arith.constant 0 : index
    %21 = vector.load %arg5[%c0_10, %c0_11] : memref<8x128xf32, #tpu.memory_space<vmem>>, vector<8x128xf32>
    tpu.vector_store %arg5[%c0_10, %c0_11], %20 {strides = array<i32>} : memref<8x128xf32, #tpu.memory_space<vmem>>, vector<8x128xf32>,
    %22 = arith.truncf %5 : vector<512x128xf32> to vector<512x128xbf16>
    %c0_12 = arith.constant 0 : index
    %c0_13 = arith.constant 0 : index
    %23 = vector.load %arg4[%c0_12, %c0_13] : memref<512x128xbf16, #tpu.memory_space<vmem>>, vector<512x128xbf16>
    tpu.vector_store %arg4[%c0_12, %c0_13], %22 {strides = array<i32>} : memref<512x128xbf16, #tpu.memory_space<vmem>>, vector<512x128xbf16>,
    return
  }
  func.func @transform_0(%arg0: i32) -> (i32, i32) {
    %c0_i32 = arith.constant 0 : i32
    %c0_i32_0 = arith.constant 0 : i32
    return %arg0, %c0_i32 : i32, i32
  }
  func.func @transform_1(%arg0: i32) -> (i32, i32) {
    %c0_i32 = arith.constant 0 : i32
    %c0_i32_0 = arith.constant 0 : i32
    %c0_i32_1 = arith.constant 0 : i32
    return %c0_i32, %c0_i32_0 : i32, i32
  }
  func.func @transform_2(%arg0: i32) -> (i32, i32) {
    %c0_i32 = arith.constant 0 : i32
    %c0_i32_0 = arith.constant 0 : i32
    %c0_i32_1 = arith.constant 0 : i32
    return %c0_i32, %c0_i32_0 : i32, i32
  }
  func.func @transform_3(%arg0: i32) -> (i32, i32) {
    %c0_i32 = arith.constant 0 : i32
    %c0_i32_0 = arith.constant 0 : i32
    return %arg0, %c0_i32 : i32, i32
  }
  func.func @transform_4(%arg0: i32) -> (i32, i32) {
    %c0_i32 = arith.constant 0 : i32
    %c0_i32_0 = arith.constant 0 : i32
    return %arg0, %c0_i32 : i32, i32
  }
}

module attributes {stable_mosaic.version = 11 : i64} {
  func.func @_bn_sigmoid_kernel(%arg0: i32, %arg1: memref<512x128xbf16, #tpu.memory_space<vmem>>, %arg2: memref<1x128xf32, #tpu.memory_space<vmem>>, %arg3: memref<1x128xf32, #tpu.memory_space<vmem>>, %arg4: memref<512x128xf32, #tpu.memory_space<vmem>>) attributes {dimension_semantics = [#tpu.dimension_semantics<parallel>], iteration_bounds = array<i64: 1>, scalar_prefetch = 0 : i64, scratch_operands = 0 : i64, tpu.core_type = #tpu.core_type<tc>, window_params = [{transform_indices = @transform_0, window_bounds = array<i64: 512, 128>}, {pipeline_mode = #tpu.pipeline_mode<synchronous>, transform_indices = @transform_1, window_bounds = array<i64: 1, 128>}, {pipeline_mode = #tpu.pipeline_mode<synchronous>, transform_indices = @transform_2, window_bounds = array<i64: 1, 128>}, {transform_indices = @transform_3, window_bounds = array<i64: 512, 128>}]} {
    %c0 = arith.constant 0 : index
    %c0_0 = arith.constant 0 : index
    %0 = vector.load %arg1[%c0, %c0_0] : memref<512x128xbf16, #tpu.memory_space<vmem>>, vector<512x128xbf16>
    %1 = arith.extf %0 : vector<512x128xbf16> to vector<512x128xf32>
    %c0_1 = arith.constant 0 : index
    %c0_2 = arith.constant 0 : index
    %2 = vector.load %arg2[%c0_1, %c0_2] : memref<1x128xf32, #tpu.memory_space<vmem>>, vector<1x128xf32>
    %3 = vector.broadcast %2 : vector<1x128xf32> to vector<512x128xf32>
    %4 = arith.mulf %1, %3 : vector<512x128xf32>
    %c0_3 = arith.constant 0 : index
    %c0_4 = arith.constant 0 : index
    %5 = vector.load %arg3[%c0_3, %c0_4] : memref<1x128xf32, #tpu.memory_space<vmem>>, vector<1x128xf32>
    %6 = vector.broadcast %5 : vector<1x128xf32> to vector<512x128xf32>
    %7 = arith.addf %4, %6 : vector<512x128xf32>
    %cst = arith.constant 0.000000e+00 : f32
    %8 = vector.broadcast %cst : f32 to vector<512x128xf32>
    %9 = arith.subf %8, %7 : vector<512x128xf32>
    %10 = math.exp %9 : vector<512x128xf32>
    %cst_5 = arith.constant 1.000000e+00 : f32
    %11 = vector.broadcast %cst_5 : f32 to vector<512x128xf32>
    %12 = arith.addf %11, %10 : vector<512x128xf32>
    %13 = tpu.reciprocal %12 {approx = true} : vector<512x128xf32> -> vector<512x128xf32>
    %cst_6 = arith.constant 3.000000e-01 : f32
    %14 = vector.broadcast %cst_6 : f32 to vector<512x128xf32>
    %15 = arith.mulf %14, %13 : vector<512x128xf32>
    %c0_7 = arith.constant 0 : index
    %c0_8 = arith.constant 0 : index
    %16 = vector.load %arg4[%c0_7, %c0_8] : memref<512x128xf32, #tpu.memory_space<vmem>>, vector<512x128xf32>
    tpu.vector_store %arg4[%c0_7, %c0_8], %15 {strides = array<i32>} : memref<512x128xf32, #tpu.memory_space<vmem>>, vector<512x128xf32>,
    return
  }
  func.func @transform_0(%arg0: i32) -> (i32, i32) {
    %c0_i32 = arith.constant 0 : i32
    %c0_i32_0 = arith.constant 0 : i32
    return %arg0, %c0_i32 : i32, i32
  }
  func.func @transform_1(%arg0: i32) -> (i32, i32) {
    %c0_i32 = arith.constant 0 : i32
    %c0_i32_0 = arith.constant 0 : i32
    %c0_i32_1 = arith.constant 0 : i32
    return %c0_i32, %c0_i32_0 : i32, i32
  }
  func.func @transform_2(%arg0: i32) -> (i32, i32) {
    %c0_i32 = arith.constant 0 : i32
    %c0_i32_0 = arith.constant 0 : i32
    %c0_i32_1 = arith.constant 0 : i32
    return %c0_i32, %c0_i32_0 : i32, i32
  }
  func.func @transform_3(%arg0: i32) -> (i32, i32) {
    %c0_i32 = arith.constant 0 : i32
    %c0_i32_0 = arith.constant 0 : i32
    return %arg0, %c0_i32 : i32, i32
  }
}

</mosaic_0001>

<llo_original>
// kernel: get_disparity_forward.3
$region0: #{get_disparity_forward.3}
  #allocation0 [shape = 'u32[]', space=smem, size = 0x4, offset = 0x4, fixed_abs, tag = 'smem constant byte address 0x4 - core index']
  #allocation1 [shape = 'u32[144,128]{1,0:T(1,128)}', space=vmem, size = 0x12000, scoped, tag = 'internal scratch']
  %s0 = inlined_call_operand.vmem [shape: bf16[512,128], index: 0, kind: input, shape index: {}]
  %s1 = inlined_call_operand.vmem [shape: f32[1,128], index: 1, kind: input, shape index: {}]
  %s2 = inlined_call_operand.vmem [shape: f32[1,128], index: 2, kind: input, shape index: {}]
  %s3 = inlined_call_operand.vmem [shape: f32[512,128], index: 3, kind: output, shape index: {}]
  %s4 = sld [smem:[#allocation0]]
  $region22: #{get_disparity_forward.3} parent=0
    _
  %s6 = ssub.s32 1, %s4
  %s7 = scalar_select 0, %s6, %s4
  // Predicated region
  $region2: #{get_disparity_forward.3} parent=0 // pred_check
    _
  $region3: #{get_disparity_forward.3} parent=0 // pred_check_branch
    %9 = sbr.rel (0) target = $region5
  $region4: #{get_disparity_forward.3} parent=0 // pred_region
    _
  $region5: #{get_disparity_forward.3} parent=0 // pred_fallthru
    _
  // Predicated region
  $region6: #{get_disparity_forward.3} parent=0 // pred_check
    _
  $region7: #{get_disparity_forward.3} parent=0 // pred_check_branch
    %11 = sbr.rel (0) target = $region9
  $region8: #{get_disparity_forward.3} parent=0 // pred_region
    _
  $region9: #{get_disparity_forward.3} parent=0 // pred_fallthru
    _
  // Predicated region
  $region10: #{get_disparity_forward.3} parent=0 // pred_check
    _
  $region11: #{get_disparity_forward.3} parent=0 // pred_check_branch
    %13 = sbr.rel (0) target = $region13
  $region12: #{get_disparity_forward.3} parent=0 // pred_region
    _
  $region13: #{get_disparity_forward.3} parent=0 // pred_fallthru
    _
  %v14 = vld [vmem:[%s0] sm:$0xf]
  %v15 = vld [vmem:[%s0 + $0x4] sm:$0xf]
  %v16 = vld [vmem:[%s0 + $0x8] sm:$0xf]
  %v17 = vld [vmem:[%s0 + $0xc] sm:$0xf]
  %v18 = vld [vmem:[%s0 + $0x10] sm:$0xf]
  %v19 = vld [vmem:[%s0 + $0x14] sm:$0xf]
  %v20 = vld [vmem:[%s0 + $0x18] sm:$0xf]
  %v21 = vld [vmem:[%s0 + $0x1c] sm:$0xf]
  %v22 = vld [vmem:[%s0 + $0x20] sm:$0xf]
  %v23 = vld [vmem:[%s0 + $0x24] sm:$0xf]
  %v24 = vld [vmem:[%s0 + $0x28] sm:$0xf]
  %v25 = vld [vmem:[%s0 + $0x2c] sm:$0xf]
  %v26 = vld [vmem:[%s0 + $0x30] sm:$0xf]
  %v27 = vld [vmem:[%s0 + $0x34] sm:$0xf]
  %v28 = vld [vmem:[%s0 + $0x38] sm:$0xf]
  %v29 = vld [vmem:[%s0 + $0x3c] sm:$0xf]
  %v30 = vld [vmem:[%s0 + $0x40] sm:$0xf]
  %v31 = vld [vmem:[%s0 + $0x44] sm:$0xf]
  %v32 = vld [vmem:[%s0 + $0x48] sm:$0xf]
  %v33 = vld [vmem:[%s0 + $0x4c] sm:$0xf]
  %v34 = vld [vmem:[%s0 + $0x50] sm:$0xf]
  %v35 = vld [vmem:[%s0 + $0x54] sm:$0xf]
  %v36 = vld [vmem:[%s0 + $0x58] sm:$0xf]
  %v37 = vld [vmem:[%s0 + $0x5c] sm:$0xf]
  %v38 = vld [vmem:[%s0 + $0x60] sm:$0xf]
  %v39 = vld [vmem:[%s0 + $0x64] sm:$0xf]
  %v40 = vld [vmem:[%s0 + $0x68] sm:$0xf]
  %v41 = vld [vmem:[%s0 + $0x6c] sm:$0xf]
  %v42 = vld [vmem:[%s0 + $0x70] sm:$0xf]
  %v43 = vld [vmem:[%s0 + $0x74] sm:$0xf]
  %v44 = vld [vmem:[%s0 + $0x78] sm:$0xf]
  %v45 = vld [vmem:[%s0 + $0x7c] sm:$0xf]
  %v46 = vld [vmem:[%s0 + $0x80] sm:$0xf]
  %v47 = vld [vmem:[%s0 + $0x84] sm:$0xf]
  %v48 = vld [vmem:[%s0 + $0x88] sm:$0xf]
  %v49 = vld [vmem:[%s0 + $0x8c] sm:$0xf]
  %v50 = vld [vmem:[%s0 + $0x90] sm:$0xf]
  %v51 = vld [vmem:[%s0 + $0x94] sm:$0xf]
  %v52 = vld [vmem:[%s0 + $0x98] sm:$0xf]
  %v53 = vld [vmem:[%s0 + $0x9c] sm:$0xf]
  %v54 = vld [vmem:[%s0 + $0xa0] sm:$0xf]
  %v55 = vld [vmem:[%s0 + $0xa4] sm:$0xf]
  %v56 = vld [vmem:[%s0 + $0xa8] sm:$0xf]
  %v57 = vld [vmem:[%s0 + $0xac] sm:$0xf]
  %v58 = vld [vmem:[%s0 + $0xb0] sm:$0xf]
  %v59 = vld [vmem:[%s0 + $0xb4] sm:$0xf]
  %v60 = vld [vmem:[%s0 + $0xb8] sm:$0xf]
  %v61 = vld [vmem:[%s0 + $0xbc] sm:$0xf]
  %v62 = vld [vmem:[%s0 + $0xc0] sm:$0xf]
  %v63 = vld [vmem:[%s0 + $0xc4] sm:$0xf]
  %v64 = vld [vmem:[%s0 + $0xc8] sm:$0xf]
  %v65 = vld [vmem:[%s0 + $0xcc] sm:$0xf]
  %v66 = vld [vmem:[%s0 + $0xd0] sm:$0xf]
  %v67 = vld [vmem:[%s0 + $0xd4] sm:$0xf]
  %v68 = vld [vmem:[%s0 + $0xd8] sm:$0xf]
  %v69 = vld [vmem:[%s0 + $0xdc] sm:$0xf]
  %v70 = vld [vmem:[%s0 + $0xe0] sm:$0xf]
  %v71 = vld [vmem:[%s0 + $0xe4] sm:$0xf]
  %v72 = vld [vmem:[%s0 + $0xe8] sm:$0xf]
  %v73 = vld [vmem:[%s0 + $0xec] sm:$0xf]
  %v74 = vld [vmem:[%s0 + $0xf0] sm:$0xf]
  %v75 = vld [vmem:[%s0 + $0xf4] sm:$0xf]
  %v76 = vld [vmem:[%s0 + $0xf8] sm:$0xf]
  %v77 = vld [vmem:[%s0 + $0xfc] sm:$0xf]
  %v78 = vunpack.c.l.bf16 %v14
  %v79 = vunpack.c.l.bf16 %v15
  %v80 = vunpack.c.l.bf16 %v16
  %v81 = vunpack.c.l.bf16 %v17
  %v82 = vunpack.c.l.bf16 %v18
  %v83 = vunpack.c.l.bf16 %v19
  %v84 = vunpack.c.l.bf16 %v20
  %v85 = vunpack.c.l.bf16 %v21
  %v86 = vunpack.c.l.bf16 %v22
  %v87 = vunpack.c.l.bf16 %v23
  %v88 = vunpack.c.l.bf16 %v24
  %v89 = vunpack.c.l.bf16 %v25
  %v90 = vunpack.c.l.bf16 %v26
  %v91 = vunpack.c.l.bf16 %v27
  %v92 = vunpack.c.l.bf16 %v28
  %v93 = vunpack.c.l.bf16 %v29
  %v94 = vunpack.c.l.bf16 %v30
  %v95 = vunpack.c.l.bf16 %v31
  %v96 = vunpack.c.l.bf16 %v32
  %v97 = vunpack.c.l.bf16 %v33
  %v98 = vunpack.c.l.bf16 %v34
  %v99 = vunpack.c.l.bf16 %v35
  %v100 = vunpack.c.l.bf16 %v36
  %v101 = vunpack.c.l.bf16 %v37
  %v102 = vunpack.c.l.bf16 %v38
  %v103 = vunpack.c.l.bf16 %v39
  %v104 = vunpack.c.l.bf16 %v40
  %v105 = vunpack.c.l.bf16 %v41
  %v106 = vunpack.c.l.bf16 %v42
  %v107 = vunpack.c.l.bf16 %v43
  %v108 = vunpack.c.l.bf16 %v44
  %v109 = vunpack.c.l.bf16 %v45
  %v110 = vunpack.c.l.bf16 %v46
  %v111 = vunpack.c.l.bf16 %v47
  %v112 = vunpack.c.l.bf16 %v48
  %v113 = vunpack.c.l.bf16 %v49
  %v114 = vunpack.c.l.bf16 %v50
  %v115 = vunpack.c.l.bf16 %v51
  %v116 = vunpack.c.l.bf16 %v52
  %v117 = vunpack.c.l.bf16 %v53
  %v118 = vunpack.c.l.bf16 %v54
  %v119 = vunpack.c.l.bf16 %v55
  %v120 = vunpack.c.l.bf16 %v56
  %v121 = vunpack.c.l.bf16 %v57
  %v122 = vunpack.c.l.bf16 %v58
  %v123 = vunpack.c.l.bf16 %v59
  %v124 = vunpack.c.l.bf16 %v60
  %v125 = vunpack.c.l.bf16 %v61
  %v126 = vunpack.c.l.bf16 %v62
  %v127 = vunpack.c.l.bf16 %v63
  %v128 = vunpack.c.l.bf16 %v64
  %v129 = vunpack.c.l.bf16 %v65
  %v130 = vunpack.c.l.bf16 %v66
  %v131 = vunpack.c.l.bf16 %v67
  %v132 = vunpack.c.l.bf16 %v68
  %v133 = vunpack.c.l.bf16 %v69
  %v134 = vunpack.c.l.bf16 %v70
  %v135 = vunpack.c.l.bf16 %v71
  %v136 = vunpack.c.l.bf16 %v72
  %v137 = vunpack.c.l.bf16 %v73
  %v138 = vunpack.c.l.bf16 %v74
  %v139 = vunpack.c.l.bf16 %v75
  %v140 = vunpack.c.l.bf16 %v76
  %v141 = vunpack.c.l.bf16 %v77
  %v142 = vld [vmem:[%s1] sm:$0x1]
  %v144 = vlaneseq
  %v145 = vshrl.u32 %v144, 7
  %v146 = vsub.s32 0, %v145
  %v147 = vrot.slane %v142, %v146
  %v149 = vmul.f32 %v78, %v147
  %v150 = vmul.f32 %v79, %v147
  %v151 = vmul.f32 %v80, %v147
  %v152 = vmul.f32 %v81, %v147
  %v153 = vmul.f32 %v82, %v147
  %v154 = vmul.f32 %v83, %v147
  %v155 = vmul.f32 %v84, %v147
  %v156 = vmul.f32 %v85, %v147
  %v157 = vmul.f32 %v86, %v147
  %v158 = vmul.f32 %v87, %v147
  %v159 = vmul.f32 %v88, %v147
  %v160 = vmul.f32 %v89, %v147
  %v161 = vmul.f32 %v90, %v147
  %v162 = vmul.f32 %v91, %v147
  %v163 = vmul.f32 %v92, %v147
  %v164 = vmul.f32 %v93, %v147
  %v165 = vmul.f32 %v94, %v147
  %v166 = vmul.f32 %v95, %v147
  %v167 = vmul.f32 %v96, %v147
  %v168 = vmul.f32 %v97, %v147
  %v169 = vmul.f32 %v98, %v147
  %v170 = vmul.f32 %v99, %v147
  %v171 = vmul.f32 %v100, %v147
  %v172 = vmul.f32 %v101, %v147
  %v173 = vmul.f32 %v102, %v147
  %v174 = vmul.f32 %v103, %v147
  %v175 = vmul.f32 %v104, %v147
  %v176 = vmul.f32 %v105, %v147
  %v177 = vmul.f32 %v106, %v147
  %v178 = vmul.f32 %v107, %v147
  %v179 = vmul.f32 %v108, %v147
  %v180 = vmul.f32 %v109, %v147
  %v181 = vmul.f32 %v110, %v147
  %v182 = vmul.f32 %v111, %v147
  %v183 = vmul.f32 %v112, %v147
  %v184 = vmul.f32 %v113, %v147
  %v185 = vmul.f32 %v114, %v147
  %v186 = vmul.f32 %v115, %v147
  %v187 = vmul.f32 %v116, %v147
  %v188 = vmul.f32 %v117, %v147
  %v189 = vmul.f32 %v118, %v147
  %v190 = vmul.f32 %v119, %v147
  %v191 = vmul.f32 %v120, %v147
  %v192 = vmul.f32 %v121, %v147
  %v193 = vmul.f32 %v122, %v147
  %v194 = vmul.f32 %v123, %v147
  %v195 = vmul.f32 %v124, %v147
  %v196 = vmul.f32 %v125, %v147
  %v197 = vmul.f32 %v126, %v147
  %v198 = vmul.f32 %v127, %v147
  %v199 = vmul.f32 %v128, %v147
  %v200 = vmul.f32 %v129, %v147
  %v201 = vmul.f32 %v130, %v147
  %v202 = vmul.f32 %v131, %v147
  %v203 = vmul.f32 %v132, %v147
  %v204 = vmul.f32 %v133, %v147
  %v205 = vmul.f32 %v134, %v147
  %v206 = vmul.f32 %v135, %v147
  %v207 = vmul.f32 %v136, %v147
  %v208 = vmul.f32 %v137, %v147
  %v209 = vmul.f32 %v138, %v147
  %v210 = vmul.f32 %v139, %v147
  %v211 = vmul.f32 %v140, %v147
  %v212 = vmul.f32 %v141, %v147
  %v213 = vld [vmem:[%s2] sm:$0x1]
  %v215 = vlaneseq
  %v216 = vshrl.u32 %v215, 7
  %v217 = vsub.s32 0, %v216
  %v218 = vrot.slane %v213, %v217
  %v220 = vadd.f32 %v149, %v218
  %v221 = vadd.f32 %v150, %v218
  %v222 = vadd.f32 %v151, %v218
  %v223 = vadd.f32 %v152, %v218
  %v224 = vadd.f32 %v153, %v218
  %v225 = vadd.f32 %v154, %v218
  %v226 = vadd.f32 %v155, %v218
  %v227 = vadd.f32 %v156, %v218
  %v228 = vadd.f32 %v157, %v218
  %v229 = vadd.f32 %v158, %v218
  %v230 = vadd.f32 %v159, %v218
  %v231 = vadd.f32 %v160, %v218
  %v232 = vadd.f32 %v161, %v218
  %v233 = vadd.f32 %v162, %v218
  %v234 = vadd.f32 %v163, %v218
  %v235 = vadd.f32 %v164, %v218
  %v236 = vadd.f32 %v165, %v218
  %v237 = vadd.f32 %v166, %v218
  %v238 = vadd.f32 %v167, %v218
  %v239 = vadd.f32 %v168, %v218
  %v240 = vadd.f32 %v169, %v218
  %v241 = vadd.f32 %v170, %v218
  %v242 = vadd.f32 %v171, %v218
  %v243 = vadd.f32 %v172, %v218
  %v244 = vadd.f32 %v173, %v218
  %v245 = vadd.f32 %v174, %v218
  %v246 = vadd.f32 %v175, %v218
  %v247 = vadd.f32 %v176, %v218
  %v248 = vadd.f32 %v177, %v218
  %v249 = vadd.f32 %v178, %v218
  %v250 = vadd.f32 %v179, %v218
  %v251 = vadd.f32 %v180, %v218
  %v252 = vadd.f32 %v181, %v218
  %v253 = vadd.f32 %v182, %v218
  %v254 = vadd.f32 %v183, %v218
  %v255 = vadd.f32 %v184, %v218
  %v256 = vadd.f32 %v185, %v218
  %v257 = vadd.f32 %v186, %v218
  %v258 = vadd.f32 %v187, %v218
  %v259 = vadd.f32 %v188, %v218
  %v260 = vadd.f32 %v189, %v218
  %v261 = vadd.f32 %v190, %v218
  %v262 = vadd.f32 %v191, %v218
  %v263 = vadd.f32 %v192, %v218
  %v264 = vadd.f32 %v193, %v218
  %v265 = vadd.f32 %v194, %v218
  %v266 = vadd.f32 %v195, %v218
  %v267 = vadd.f32 %v196, %v218
  %v268 = vadd.f32 %v197, %v218
  %v269 = vadd.f32 %v198, %v218
  %v270 = vadd.f32 %v199, %v218
  %v271 = vadd.f32 %v200, %v218
  %v272 = vadd.f32 %v201, %v218
  %v273 = vadd.f32 %v202, %v218
  %v274 = vadd.f32 %v203, %v218
  %v275 = vadd.f32 %v204, %v218
  %v276 = vadd.f32 %v205, %v218
  %v277 = vadd.f32 %v206, %v218
  %v278 = vadd.f32 %v207, %v218
  %v279 = vadd.f32 %v208, %v218
  %v280 = vadd.f32 %v209, %v218
  %v281 = vadd.f32 %v210, %v218
  %v282 = vadd.f32 %v211, %v218
  %v283 = vadd.f32 %v212, %v218
  %v284 = vsub.f32 0.0, %v220
  %v285 = vsub.f32 0.0, %v221
  %v286 = vsub.f32 0.0, %v222
  %v287 = vsub.f32 0.0, %v223
  %v288 = vsub.f32 0.0, %v224
  %v289 = vsub.f32 0.0, %v225
  %v290 = vsub.f32 0.0, %v226
  %v291 = vsub.f32 0.0, %v227
  %v292 = vsub.f32 0.0, %v228
  %v293 = vsub.f32 0.0, %v229
  %v294 = vsub.f32 0.0, %v230
  %v295 = vsub.f32 0.0, %v231
  %v296 = vsub.f32 0.0, %v232
  %v297 = vsub.f32 0.0, %v233
  %v298 = vsub.f32 0.0, %v234
  %v299 = vsub.f32 0.0, %v235
  %v300 = vsub.f32 0.0, %v236
  %v301 = vsub.f32 0.0, %v237
  %v302 = vsub.f32 0.0, %v238
  %v303 = vsub.f32 0.0, %v239
  %v304 = vsub.f32 0.0, %v240
  %v305 = vsub.f32 0.0, %v241
  %v306 = vsub.f32 0.0, %v242
  %v307 = vsub.f32 0.0, %v243
  %v308 = vsub.f32 0.0, %v244
  %v309 = vsub.f32 0.0, %v245
  %v310 = vsub.f32 0.0, %v246
  %v311 = vsub.f32 0.0, %v247
  %v312 = vsub.f32 0.0, %v248
  %v313 = vsub.f32 0.0, %v249
  %v314 = vsub.f32 0.0, %v250
  %v315 = vsub.f32 0.0, %v251
  %v316 = vsub.f32 0.0, %v252
  %v317 = vsub.f32 0.0, %v253
  %v318 = vsub.f32 0.0, %v254
  %v319 = vsub.f32 0.0, %v255
  %v320 = vsub.f32 0.0, %v256
  %v321 = vsub.f32 0.0, %v257
  %v322 = vsub.f32 0.0, %v258
  %v323 = vsub.f32 0.0, %v259
  %v324 = vsub.f32 0.0, %v260
  %v325 = vsub.f32 0.0, %v261
  %v326 = vsub.f32 0.0, %v262
  %v327 = vsub.f32 0.0, %v263
  %v328 = vsub.f32 0.0, %v264
  %v329 = vsub.f32 0.0, %v265
  %v330 = vsub.f32 0.0, %v266
  %v331 = vsub.f32 0.0, %v267
  %v332 = vsub.f32 0.0, %v268
  %v333 = vsub.f32 0.0, %v269
  %v334 = vsub.f32 0.0, %v270
  %v335 = vsub.f32 0.0, %v271
  %v336 = vsub.f32 0.0, %v272
  %v337 = vsub.f32 0.0, %v273
  %v338 = vsub.f32 0.0, %v274
  %v339 = vsub.f32 0.0, %v275
  %v340 = vsub.f32 0.0, %v276
  %v341 = vsub.f32 0.0, %v277
  %v342 = vsub.f32 0.0, %v278
  %v343 = vsub.f32 0.0, %v279
  %v344 = vsub.f32 0.0, %v280
  %v345 = vsub.f32 0.0, %v281
  %v346 = vsub.f32 0.0, %v282
  %v347 = vsub.f32 0.0, %v283
  %v348 = vmul.f32 %v284, 1.442695
  %v349 = vpow.pop %v348
  %v350 = vmul.f32 %v285, 1.442695
  %v351 = vpow.pop %v350
  %v352 = vmul.f32 %v286, 1.442695
  %v353 = vpow.pop %v352
  %v354 = vmul.f32 %v287, 1.442695
  %v355 = vpow.pop %v354
  %v356 = vmul.f32 %v288, 1.442695
  %v357 = vpow.pop %v356
  %v358 = vmul.f32 %v289, 1.442695
  %v359 = vpow.pop %v358
  %v360 = vmul.f32 %v290, 1.442695
  %v361 = vpow.pop %v360
  %v362 = vmul.f32 %v291, 1.442695
  %v363 = vpow.pop %v362
  %v364 = vmul.f32 %v292, 1.442695
  %v365 = vpow.pop %v364
  %v366 = vmul.f32 %v293, 1.442695
  %v367 = vpow.pop %v366
  %v368 = vmul.f32 %v294, 1.442695
  %v369 = vpow.pop %v368
  %v370 = vmul.f32 %v295, 1.442695
  %v371 = vpow.pop %v370
  %v372 = vmul.f32 %v296, 1.442695
  %v373 = vpow.pop %v372
  %v374 = vmul.f32 %v297, 1.442695
  %v375 = vpow.pop %v374
  %v376 = vmul.f32 %v298, 1.442695
  %v377 = vpow.pop %v376
  %v378 = vmul.f32 %v299, 1.442695
  %v379 = vpow.pop %v378
  %v380 = vmul.f32 %v300, 1.442695
  %v381 = vpow.pop %v380
  %v382 = vmul.f32 %v301, 1.442695
  %v383 = vpow.pop %v382
  %v384 = vmul.f32 %v302, 1.442695
  %v385 = vpow.pop %v384
  %v386 = vmul.f32 %v303, 1.442695
  %v387 = vpow.pop %v386
  %v388 = vmul.f32 %v304, 1.442695
  %v389 = vpow.pop %v388
  %v390 = vmul.f32 %v305, 1.442695
  %v391 = vpow.pop %v390
  %v392 = vmul.f32 %v306, 1.442695
  %v393 = vpow.pop %v392
  %v394 = vmul.f32 %v307, 1.442695
  %v395 = vpow.pop %v394
  %v396 = vmul.f32 %v308, 1.442695
  %v397 = vpow.pop %v396
  %v398 = vmul.f32 %v309, 1.442695
  %v399 = vpow.pop %v398
  %v400 = vmul.f32 %v310, 1.442695
  %v401 = vpow.pop %v400
  %v402 = vmul.f32 %v311, 1.442695
  %v403 = vpow.pop %v402
  %v404 = vmul.f32 %v312, 1.442695
  %v405 = vpow.pop %v404
  %v406 = vmul.f32 %v313, 1.442695
  %v407 = vpow.pop %v406
  %v408 = vmul.f32 %v314, 1.442695
  %v409 = vpow.pop %v408
  %v410 = vmul.f32 %v315, 1.442695
  %v411 = vpow.pop %v410
  %v412 = vmul.f32 %v316, 1.442695
  %v413 = vpow.pop %v412
  %v414 = vmul.f32 %v317, 1.442695
  %v415 = vpow.pop %v414
  %v416 = vmul.f32 %v318, 1.442695
  %v417 = vpow.pop %v416
  %v418 = vmul.f32 %v319, 1.442695
  %v419 = vpow.pop %v418
  %v420 = vmul.f32 %v320, 1.442695
  %v421 = vpow.pop %v420
  %v422 = vmul.f32 %v321, 1.442695
  %v423 = vpow.pop %v422
  %v424 = vmul.f32 %v322, 1.442695
  %v425 = vpow.pop %v424
  %v426 = vmul.f32 %v323, 1.442695
  %v427 = vpow.pop %v426
  %v428 = vmul.f32 %v324, 1.442695
  %v429 = vpow.pop %v428
  %v430 = vmul.f32 %v325, 1.442695
  %v431 = vpow.pop %v430
  %v432 = vmul.f32 %v326, 1.442695
  %v433 = vpow.pop %v432
  %v434 = vmul.f32 %v327, 1.442695
  %v435 = vpow.pop %v434
  %v436 = vmul.f32 %v328, 1.442695
  %v437 = vpow.pop %v436
  %v438 = vmul.f32 %v329, 1.442695
  %v439 = vpow.pop %v438
  %v440 = vmul.f32 %v330, 1.442695
  %v441 = vpow.pop %v440
  %v442 = vmul.f32 %v331, 1.442695
  %v443 = vpow.pop %v442
  %v444 = vmul.f32 %v332, 1.442695
  %v445 = vpow.pop %v444
  %v446 = vmul.f32 %v333, 1.442695
  %v447 = vpow.pop %v446
  %v448 = vmul.f32 %v334, 1.442695
  %v449 = vpow.pop %v448
  %v450 = vmul.f32 %v335, 1.442695
  %v451 = vpow.pop %v450
  %v452 = vmul.f32 %v336, 1.442695
  %v453 = vpow.pop %v452
  %v454 = vmul.f32 %v337, 1.442695
  %v455 = vpow.pop %v454
  %v456 = vmul.f32 %v338, 1.442695
  %v457 = vpow.pop %v456
  %v458 = vmul.f32 %v339, 1.442695
  %v459 = vpow.pop %v458
  %v460 = vmul.f32 %v340, 1.442695
  %v461 = vpow.pop %v460
  %v462 = vmul.f32 %v341, 1.442695
  %v463 = vpow.pop %v462
  %v464 = vmul.f32 %v342, 1.442695
  %v465 = vpow.pop %v464
  %v466 = vmul.f32 %v343, 1.442695
  %v467 = vpow.pop %v466
  %v468 = vmul.f32 %v344, 1.442695
  %v469 = vpow.pop %v468
  %v470 = vmul.f32 %v345, 1.442695
  %v471 = vpow.pop %v470
  %v472 = vmul.f32 %v346, 1.442695
  %v473 = vpow.pop %v472
  %v474 = vmul.f32 %v347, 1.442695
  %v475 = vpow.pop %v474
  %v476 = vadd.f32 %v349, 1.0
  %v477 = vadd.f32 %v351, 1.0
  %v478 = vadd.f32 %v353, 1.0
  %v479 = vadd.f32 %v355, 1.0
  %v480 = vadd.f32 %v357, 1.0
  %v481 = vadd.f32 %v359, 1.0
  %v482 = vadd.f32 %v361, 1.0
  %v483 = vadd.f32 %v363, 1.0
  %v484 = vadd.f32 %v365, 1.0
  %v485 = vadd.f32 %v367, 1.0
  %v486 = vadd.f32 %v369, 1.0
  %v487 = vadd.f32 %v371, 1.0
  %v488 = vadd.f32 %v373, 1.0
  %v489 = vadd.f32 %v375, 1.0
  %v490 = vadd.f32 %v377, 1.0
  %v491 = vadd.f32 %v379, 1.0
  %v492 = vadd.f32 %v381, 1.0
  %v493 = vadd.f32 %v383, 1.0
  %v494 = vadd.f32 %v385, 1.0
  %v495 = vadd.f32 %v387, 1.0
  %v496 = vadd.f32 %v389, 1.0
  %v497 = vadd.f32 %v391, 1.0
  %v498 = vadd.f32 %v393, 1.0
  %v499 = vadd.f32 %v395, 1.0
  %v500 = vadd.f32 %v397, 1.0
  %v501 = vadd.f32 %v399, 1.0
  %v502 = vadd.f32 %v401, 1.0
  %v503 = vadd.f32 %v403, 1.0
  %v504 = vadd.f32 %v405, 1.0
  %v505 = vadd.f32 %v407, 1.0
  %v506 = vadd.f32 %v409, 1.0
  %v507 = vadd.f32 %v411, 1.0
  %v508 = vadd.f32 %v413, 1.0
  %v509 = vadd.f32 %v415, 1.0
  %v510 = vadd.f32 %v417, 1.0
  %v511 = vadd.f32 %v419, 1.0
  %v512 = vadd.f32 %v421, 1.0
  %v513 = vadd.f32 %v423, 1.0
  %v514 = vadd.f32 %v425, 1.0
  %v515 = vadd.f32 %v427, 1.0
  %v516 = vadd.f32 %v429, 1.0
  %v517 = vadd.f32 %v431, 1.0
  %v518 = vadd.f32 %v433, 1.0
  %v519 = vadd.f32 %v435, 1.0
  %v520 = vadd.f32 %v437, 1.0
  %v521 = vadd.f32 %v439, 1.0
  %v522 = vadd.f32 %v441, 1.0
  %v523 = vadd.f32 %v443, 1.0
  %v524 = vadd.f32 %v445, 1.0
  %v525 = vadd.f32 %v447, 1.0
  %v526 = vadd.f32 %v449, 1.0
  %v527 = vadd.f32 %v451, 1.0
  %v528 = vadd.f32 %v453, 1.0
  %v529 = vadd.f32 %v455, 1.0
  %v530 = vadd.f32 %v457, 1.0
  %v531 = vadd.f32 %v459, 1.0
  %v532 = vadd.f32 %v461, 1.0
  %v533 = vadd.f32 %v463, 1.0
  %v534 = vadd.f32 %v465, 1.0
  %v535 = vadd.f32 %v467, 1.0
  %v536 = vadd.f32 %v469, 1.0
  %v537 = vadd.f32 %v471, 1.0
  %v538 = vadd.f32 %v473, 1.0
  %v539 = vadd.f32 %v475, 1.0
  %v540 = vrcp.pop %v476
  %v541 = vrcp.pop %v477
  %v542 = vrcp.pop %v478
  %v543 = vrcp.pop %v479
  %v544 = vrcp.pop %v480
  %v545 = vrcp.pop %v481
  %v546 = vrcp.pop %v482
  %v547 = vrcp.pop %v483
  %v548 = vrcp.pop %v484
  %v549 = vrcp.pop %v485
  %v550 = vrcp.pop %v486
  %v551 = vrcp.pop %v487
  %v552 = vrcp.pop %v488
  %v553 = vrcp.pop %v489
  %v554 = vrcp.pop %v490
  %v555 = vrcp.pop %v491
  %v556 = vrcp.pop %v492
  %v557 = vrcp.pop %v493
  %v558 = vrcp.pop %v494
  %v559 = vrcp.pop %v495
  %v560 = vrcp.pop %v496
  %v561 = vrcp.pop %v497
  %v562 = vrcp.pop %v498
  %v563 = vrcp.pop %v499
  %v564 = vrcp.pop %v500
  %v565 = vrcp.pop %v501
  %v566 = vrcp.pop %v502
  %v567 = vrcp.pop %v503
  %v568 = vrcp.pop %v504
  %v569 = vrcp.pop %v505
  %v570 = vrcp.pop %v506
  %v571 = vrcp.pop %v507
  %v572 = vrcp.pop %v508
  %v573 = vrcp.pop %v509
  %v574 = vrcp.pop %v510
  %v575 = vrcp.pop %v511
  %v576 = vrcp.pop %v512
  %v577 = vrcp.pop %v513
  %v578 = vrcp.pop %v514
  %v579 = vrcp.pop %v515
  %v580 = vrcp.pop %v516
  %v581 = vrcp.pop %v517
  %v582 = vrcp.pop %v518
  %v583 = vrcp.pop %v519
  %v584 = vrcp.pop %v520
  %v585 = vrcp.pop %v521
  %v586 = vrcp.pop %v522
  %v587 = vrcp.pop %v523
  %v588 = vrcp.pop %v524
  %v589 = vrcp.pop %v525
  %v590 = vrcp.pop %v526
  %v591 = vrcp.pop %v527
  %v592 = vrcp.pop %v528
  %v593 = vrcp.pop %v529
  %v594 = vrcp.pop %v530
  %v595 = vrcp.pop %v531
  %v596 = vrcp.pop %v532
  %v597 = vrcp.pop %v533
  %v598 = vrcp.pop %v534
  %v599 = vrcp.pop %v535
  %v600 = vrcp.pop %v536
  %v601 = vrcp.pop %v537
  %v602 = vrcp.pop %v538
  %v603 = vrcp.pop %v539
  %v604 = vmul.f32 %v540, 0.3
  %v605 = vmul.f32 %v541, 0.3
  %v606 = vmul.f32 %v542, 0.3
  %v607 = vmul.f32 %v543, 0.3
  %v608 = vmul.f32 %v544, 0.3
  %v609 = vmul.f32 %v545, 0.3
  %v610 = vmul.f32 %v546, 0.3
  %v611 = vmul.f32 %v547, 0.3
  %v612 = vmul.f32 %v548, 0.3
  %v613 = vmul.f32 %v549, 0.3
  %v614 = vmul.f32 %v550, 0.3
  %v615 = vmul.f32 %v551, 0.3
  %v616 = vmul.f32 %v552, 0.3
  %v617 = vmul.f32 %v553, 0.3
  %v618 = vmul.f32 %v554, 0.3
  %v619 = vmul.f32 %v555, 0.3
  %v620 = vmul.f32 %v556, 0.3
  %v621 = vmul.f32 %v557, 0.3
  %v622 = vmul.f32 %v558, 0.3
  %v623 = vmul.f32 %v559, 0.3
  %v624 = vmul.f32 %v560, 0.3
  %v625 = vmul.f32 %v561, 0.3
  %v626 = vmul.f32 %v562, 0.3
  %v627 = vmul.f32 %v563, 0.3
  %v628 = vmul.f32 %v564, 0.3
  %v629 = vmul.f32 %v565, 0.3
  %v630 = vmul.f32 %v566, 0.3
  %v631 = vmul.f32 %v567, 0.3
  %v632 = vmul.f32 %v568, 0.3
  %v633 = vmul.f32 %v569, 0.3
  %v634 = vmul.f32 %v570, 0.3
  %v635 = vmul.f32 %v571, 0.3
  %v636 = vmul.f32 %v572, 0.3
  %v637 = vmul.f32 %v573, 0.3
  %v638 = vmul.f32 %v574, 0.3
  %v639 = vmul.f32 %v575, 0.3
  %v640 = vmul.f32 %v576, 0.3
  %v641 = vmul.f32 %v577, 0.3
  %v642 = vmul.f32 %v578, 0.3
  %v643 = vmul.f32 %v579, 0.3
  %v644 = vmul.f32 %v580, 0.3
  %v645 = vmul.f32 %v581, 0.3
  %v646 = vmul.f32 %v582, 0.3
  %v647 = vmul.f32 %v583, 0.3
  %v648 = vmul.f32 %v584, 0.3
  %v649 = vmul.f32 %v585, 0.3
  %v650 = vmul.f32 %v586, 0.3
  %v651 = vmul.f32 %v587, 0.3
  %v652 = vmul.f32 %v588, 0.3
  %v653 = vmul.f32 %v589, 0.3
  %v654 = vmul.f32 %v590, 0.3
  %v655 = vmul.f32 %v591, 0.3
  %v656 = vmul.f32 %v592, 0.3
  %v657 = vmul.f32 %v593, 0.3
  %v658 = vmul.f32 %v594, 0.3
  %v659 = vmul.f32 %v595, 0.3
  %v660 = vmul.f32 %v596, 0.3
  %v661 = vmul.f32 %v597, 0.3
  %v662 = vmul.f32 %v598, 0.3
  %v663 = vmul.f32 %v599, 0.3
  %v664 = vmul.f32 %v600, 0.3
  %v665 = vmul.f32 %v601, 0.3
  %v666 = vmul.f32 %v602, 0.3
  %v667 = vmul.f32 %v603, 0.3
  %668 = vst [vmem:[%s3] sm:$0xff] %v604
  %669 = vst [vmem:[%s3 + $0x8] sm:$0xff] %v605
  %670 = vst [vmem:[%s3 + $0x10] sm:$0xff] %v606
  %671 = vst [vmem:[%s3 + $0x18] sm:$0xff] %v607
  %672 = vst [vmem:[%s3 + $0x20] sm:$0xff] %v608
  %673 = vst [vmem:[%s3 + $0x28] sm:$0xff] %v609
  %674 = vst [vmem:[%s3 + $0x30] sm:$0xff] %v610
  %675 = vst [vmem:[%s3 + $0x38] sm:$0xff] %v611
  %676 = vst [vmem:[%s3 + $0x40] sm:$0xff] %v612
  %677 = vst [vmem:[%s3 + $0x48] sm:$0xff] %v613
  %678 = vst [vmem:[%s3 + $0x50] sm:$0xff] %v614
  %679 = vst [vmem:[%s3 + $0x58] sm:$0xff] %v615
  %680 = vst [vmem:[%s3 + $0x60] sm:$0xff] %v616
  %681 = vst [vmem:[%s3 + $0x68] sm:$0xff] %v617
  %682 = vst [vmem:[%s3 + $0x70] sm:$0xff] %v618
  %683 = vst [vmem:[%s3 + $0x78] sm:$0xff] %v619
  %684 = vst [vmem:[%s3 + $0x80] sm:$0xff] %v620
  %685 = vst [vmem:[%s3 + $0x88] sm:$0xff] %v621
  %686 = vst [vmem:[%s3 + $0x90] sm:$0xff] %v622
  %687 = vst [vmem:[%s3 + $0x98] sm:$0xff] %v623
  %688 = vst [vmem:[%s3 + $0xa0] sm:$0xff] %v624
  %689 = vst [vmem:[%s3 + $0xa8] sm:$0xff] %v625
  %690 = vst [vmem:[%s3 + $0xb0] sm:$0xff] %v626
  %691 = vst [vmem:[%s3 + $0xb8] sm:$0xff] %v627
  %692 = vst [vmem:[%s3 + $0xc0] sm:$0xff] %v628
  %693 = vst [vmem:[%s3 + $0xc8] sm:$0xff] %v629
  %694 = vst [vmem:[%s3 + $0xd0] sm:$0xff] %v630
  %695 = vst [vmem:[%s3 + $0xd8] sm:$0xff] %v631
  %696 = vst [vmem:[%s3 + $0xe0] sm:$0xff] %v632
  %697 = vst [vmem:[%s3 + $0xe8] sm:$0xff] %v633
  %698 = vst [vmem:[%s3 + $0xf0] sm:$0xff] %v634
  %699 = vst [vmem:[%s3 + $0xf8] sm:$0xff] %v635
  %700 = vst [vmem:[%s3 + $0x100] sm:$0xff] %v636
  %701 = vst [vmem:[%s3 + $0x108] sm:$0xff] %v637
  %702 = vst [vmem:[%s3 + $0x110] sm:$0xff] %v638
  %703 = vst [vmem:[%s3 + $0x118] sm:$0xff] %v639
  %704 = vst [vmem:[%s3 + $0x120] sm:$0xff] %v640
  %705 = vst [vmem:[%s3 + $0x128] sm:$0xff] %v641
  %706 = vst [vmem:[%s3 + $0x130] sm:$0xff] %v642
  %707 = vst [vmem:[%s3 + $0x138] sm:$0xff] %v643
  %708 = vst [vmem:[%s3 + $0x140] sm:$0xff] %v644
  %709 = vst [vmem:[%s3 + $0x148] sm:$0xff] %v645
  %710 = vst [vmem:[%s3 + $0x150] sm:$0xff] %v646
  %711 = vst [vmem:[%s3 + $0x158] sm:$0xff] %v647
  %712 = vst [vmem:[%s3 + $0x160] sm:$0xff] %v648
  %713 = vst [vmem:[%s3 + $0x168] sm:$0xff] %v649
  %714 = vst [vmem:[%s3 + $0x170] sm:$0xff] %v650
  %715 = vst [vmem:[%s3 + $0x178] sm:$0xff] %v651
  %716 = vst [vmem:[%s3 + $0x180] sm:$0xff] %v652
  %717 = vst [vmem:[%s3 + $0x188] sm:$0xff] %v653
  %718 = vst [vmem:[%s3 + $0x190] sm:$0xff] %v654
  %719 = vst [vmem:[%s3 + $0x198] sm:$0xff] %v655
  %720 = vst [vmem:[%s3 + $0x1a0] sm:$0xff] %v656
  %721 = vst [vmem:[%s3 + $0x1a8] sm:$0xff] %v657
  %722 = vst [vmem:[%s3 + $0x1b0] sm:$0xff] %v658
  %723 = vst [vmem:[%s3 + $0x1b8] sm:$0xff] %v659
  %724 = vst [vmem:[%s3 + $0x1c0] sm:$0xff] %v660
  %725 = vst [vmem:[%s3 + $0x1c8] sm:$0xff] %v661
  %726 = vst [vmem:[%s3 + $0x1d0] sm:$0xff] %v662
  %727 = vst [vmem:[%s3 + $0x1d8] sm:$0xff] %v663
  %728 = vst [vmem:[%s3 + $0x1e0] sm:$0xff] %v664
  %729 = vst [vmem:[%s3 + $0x1e8] sm:$0xff] %v665
  %730 = vst [vmem:[%s3 + $0x1f0] sm:$0xff] %v666
  %731 = vst [vmem:[%s3 + $0x1f8] sm:$0xff] %v667
  // Predicated region
  $region14: #{get_disparity_forward.3} parent=0 // pred_check
    _
  $region15: #{get_disparity_forward.3} parent=0 // pred_check_branch
    %733 = sbr.rel (0) target = $region17
  $region16: #{get_disparity_forward.3} parent=0 // pred_region
    _
  $region17: #{get_disparity_forward.3} parent=0 // pred_fallthru
    _
  // Predicated region
  $region18: #{get_disparity_forward.3} parent=0 // pred_check
    _
  $region19: #{get_disparity_forward.3} parent=0 // pred_check_branch
    %735 = sbr.rel (0) target = $region21
  $region20: #{get_disparity_forward.3} parent=0 // pred_region
    _
  $region21: #{get_disparity_forward.3} parent=0 // pred_fallthru
    _

// kernel: get_disparity_forward.2
$region0: #{get_disparity_forward.2}
  #allocation0 [shape = 'u32[]', space=smem, size = 0x4, offset = 0x4, fixed_abs, tag = 'smem constant byte address 0x4 - core index']
  #allocation1 [shape = 'u32[144,128]{1,0:T(1,128)}', space=vmem, size = 0x12000, scoped, tag = 'internal scratch']
  %s0 = inlined_call_operand.vmem [shape: bf16[512,36], index: 0, kind: input, shape index: {}]
  %s1 = inlined_call_operand.vmem [shape: bf16[36,128], index: 1, kind: input, shape index: {}]
  %s2 = inlined_call_operand.vmem [shape: f32[1,128], index: 2, kind: input, shape index: {}]
  %s3 = inlined_call_operand.vmem [shape: bf16[512,128], index: 3, kind: output, shape index: {0}]
  %s4 = inlined_call_operand.vmem [shape: f32[8,128], index: 4, kind: output, shape index: {1}]
  %5 = xla_tuple %s3, %s4
  %s6 = sld [smem:[#allocation0]]
  $region30: #{get_disparity_forward.2} parent=0
    _
  %s8 = ssub.s32 1, %s6
  %s9 = scalar_select 0, %s8, %s6
  // Predicated region
  $region2: #{get_disparity_forward.2} parent=0 // pred_check
    _
  $region3: #{get_disparity_forward.2} parent=0 // pred_check_branch
    %11 = sbr.rel (0) target = $region5
  $region4: #{get_disparity_forward.2} parent=0 // pred_region
    _
  $region5: #{get_disparity_forward.2} parent=0 // pred_fallthru
    _
  // Predicated region
  $region6: #{get_disparity_forward.2} parent=0 // pred_check
    _
  $region7: #{get_disparity_forward.2} parent=0 // pred_check_branch
    %13 = sbr.rel (0) target = $region9
  $region8: #{get_disparity_forward.2} parent=0 // pred_region
    _
  $region9: #{get_disparity_forward.2} parent=0 // pred_fallthru
    _
  // Predicated region
  $region10: #{get_disparity_forward.2} parent=0 // pred_check
    _
  $region11: #{get_disparity_forward.2} parent=0 // pred_check_branch
    %15 = sbr.rel (0) target = $region13
  $region12: #{get_disparity_forward.2} parent=0 // pred_region
    _
  $region13: #{get_disparity_forward.2} parent=0 // pred_fallthru
    _
  %v17 = vld [vmem:[%s0] sm:$0xf]
  %v18 = vld [vmem:[%s0 + $0x4] sm:$0xf]
  %v19 = vld [vmem:[%s0 + $0x8] sm:$0xf]
  %v20 = vld [vmem:[%s0 + $0xc] sm:$0xf]
  %v21 = vld [vmem:[%s0 + $0x10] sm:$0xf]
  %v22 = vld [vmem:[%s0 + $0x14] sm:$0xf]
  %v23 = vld [vmem:[%s0 + $0x18] sm:$0xf]
  %v24 = vld [vmem:[%s0 + $0x1c] sm:$0xf]
  %v25 = vld [vmem:[%s0 + $0x20] sm:$0xf]
  %v26 = vld [vmem:[%s0 + $0x24] sm:$0xf]
  %v27 = vld [vmem:[%s0 + $0x28] sm:$0xf]
  %v28 = vld [vmem:[%s0 + $0x2c] sm:$0xf]
  %v29 = vld [vmem:[%s0 + $0x30] sm:$0xf]
  %v30 = vld [vmem:[%s0 + $0x34] sm:$0xf]
  %v31 = vld [vmem:[%s0 + $0x38] sm:$0xf]
  %v32 = vld [vmem:[%s0 + $0x3c] sm:$0xf]
  %v33 = vld [vmem:[%s0 + $0x40] sm:$0xf]
  %v34 = vld [vmem:[%s0 + $0x44] sm:$0xf]
  %v35 = vld [vmem:[%s0 + $0x48] sm:$0xf]
  %v36 = vld [vmem:[%s0 + $0x4c] sm:$0xf]
  %v37 = vld [vmem:[%s0 + $0x50] sm:$0xf]
  %v38 = vld [vmem:[%s0 + $0x54] sm:$0xf]
  %v39 = vld [vmem:[%s0 + $0x58] sm:$0xf]
  %v40 = vld [vmem:[%s0 + $0x5c] sm:$0xf]
  %v41 = vld [vmem:[%s0 + $0x60] sm:$0xf]
  %v42 = vld [vmem:[%s0 + $0x64] sm:$0xf]
  %v43 = vld [vmem:[%s0 + $0x68] sm:$0xf]
  %v44 = vld [vmem:[%s0 + $0x6c] sm:$0xf]
  %v45 = vld [vmem:[%s0 + $0x70] sm:$0xf]
  %v46 = vld [vmem:[%s0 + $0x74] sm:$0xf]
  %v47 = vld [vmem:[%s0 + $0x78] sm:$0xf]
  %v48 = vld [vmem:[%s0 + $0x7c] sm:$0xf]
  %v49 = vld [vmem:[%s0 + $0x80] sm:$0xf]
  %v50 = vld [vmem:[%s0 + $0x84] sm:$0xf]
  %v51 = vld [vmem:[%s0 + $0x88] sm:$0xf]
  %v52 = vld [vmem:[%s0 + $0x8c] sm:$0xf]
  %v53 = vld [vmem:[%s0 + $0x90] sm:$0xf]
  %v54 = vld [vmem:[%s0 + $0x94] sm:$0xf]
  %v55 = vld [vmem:[%s0 + $0x98] sm:$0xf]
  %v56 = vld [vmem:[%s0 + $0x9c] sm:$0xf]
  %v57 = vld [vmem:[%s0 + $0xa0] sm:$0xf]
  %v58 = vld [vmem:[%s0 + $0xa4] sm:$0xf]
  %v59 = vld [vmem:[%s0 + $0xa8] sm:$0xf]
  %v60 = vld [vmem:[%s0 + $0xac] sm:$0xf]
  %v61 = vld [vmem:[%s0 + $0xb0] sm:$0xf]
  %v62 = vld [vmem:[%s0 + $0xb4] sm:$0xf]
  %v63 = vld [vmem:[%s0 + $0xb8] sm:$0xf]
  %v64 = vld [vmem:[%s0 + $0xbc] sm:$0xf]
  %v65 = vld [vmem:[%s0 + $0xc0] sm:$0xf]
  %v66 = vld [vmem:[%s0 + $0xc4] sm:$0xf]
  %v67 = vld [vmem:[%s0 + $0xc8] sm:$0xf]
  %v68 = vld [vmem:[%s0 + $0xcc] sm:$0xf]
  %v69 = vld [vmem:[%s0 + $0xd0] sm:$0xf]
  %v70 = vld [vmem:[%s0 + $0xd4] sm:$0xf]
  %v71 = vld [vmem:[%s0 + $0xd8] sm:$0xf]
  %v72 = vld [vmem:[%s0 + $0xdc] sm:$0xf]
  %v73 = vld [vmem:[%s0 + $0xe0] sm:$0xf]
  %v74 = vld [vmem:[%s0 + $0xe4] sm:$0xf]
  %v75 = vld [vmem:[%s0 + $0xe8] sm:$0xf]
  %v76 = vld [vmem:[%s0 + $0xec] sm:$0xf]
  %v77 = vld [vmem:[%s0 + $0xf0] sm:$0xf]
  %v78 = vld [vmem:[%s0 + $0xf4] sm:$0xf]
  %v79 = vld [vmem:[%s0 + $0xf8] sm:$0xf]
  %v80 = vld [vmem:[%s0 + $0xfc] sm:$0xf]
  %v81 = vld [vmem:[%s1] sm:$0xf]
  %v82 = vld [vmem:[%s1 + $0x4] sm:$0xf]
  %v83 = vld [vmem:[%s1 + $0x8] sm:$0xf]
  %v84 = vld [vmem:[%s1 + $0xc] sm:$0xf]
  %v85 = vld [vmem:[%s1 + $0x10] sm:$0x3]
  %v86 = vld [vmem:[%s2] sm:$0x1]
  %v88 = vlaneseq
  %v89 = vshrl.u32 %v88, 7
  %v90 = vsub.s32 0, %v89
  %v91 = vrot.slane %v86, %v90
  %v157 = vunpack.c.l.b16 %v17
  %v158 = vunpack.c.l.b16 %v18
  %v159 = vunpack.c.l.b16 %v19
  %v160 = vunpack.c.l.b16 %v20
  %v161 = vunpack.c.l.b16 %v21
  %v162 = vunpack.c.l.b16 %v22
  %v163 = vunpack.c.l.b16 %v23
  %v164 = vunpack.c.l.b16 %v24
  %v165 = vunpack.c.l.b16 %v25
  %v166 = vunpack.c.l.b16 %v26
  %v167 = vunpack.c.l.b16 %v27
  %v168 = vunpack.c.l.b16 %v28
  %v169 = vunpack.c.l.b16 %v29
  %v170 = vunpack.c.l.b16 %v30
  %v171 = vunpack.c.l.b16 %v31
  %v172 = vunpack.c.l.b16 %v32
  %v173 = vunpack.c.l.b16 %v33
  %v174 = vunpack.c.l.b16 %v34
  %v175 = vunpack.c.l.b16 %v35
  %v176 = vunpack.c.l.b16 %v36
  %v177 = vunpack.c.l.b16 %v37
  %v178 = vunpack.c.l.b16 %v38
  %v179 = vunpack.c.l.b16 %v39
  %v180 = vunpack.c.l.b16 %v40
  %v181 = vunpack.c.l.b16 %v41
  %v182 = vunpack.c.l.b16 %v42
  %v183 = vunpack.c.l.b16 %v43
  %v184 = vunpack.c.l.b16 %v44
  %v185 = vunpack.c.l.b16 %v45
  %v186 = vunpack.c.l.b16 %v46
  %v187 = vunpack.c.l.b16 %v47
  %v188 = vunpack.c.l.b16 %v48
  %v189 = vunpack.c.l.b16 %v49
  %v190 = vunpack.c.l.b16 %v50
  %v191 = vunpack.c.l.b16 %v51
  %v192 = vunpack.c.l.b16 %v52
  %v193 = vunpack.c.l.b16 %v53
  %v194 = vunpack.c.l.b16 %v54
  %v195 = vunpack.c.l.b16 %v55
  %v196 = vunpack.c.l.b16 %v56
  %v197 = vunpack.c.l.b16 %v57
  %v198 = vunpack.c.l.b16 %v58
  %v199 = vunpack.c.l.b16 %v59
  %v200 = vunpack.c.l.b16 %v60
  %v201 = vunpack.c.l.b16 %v61
  %v202 = vunpack.c.l.b16 %v62
  %v203 = vunpack.c.l.b16 %v63
  %v204 = vunpack.c.l.b16 %v64
  %v205 = vunpack.c.l.b16 %v65
  %v206 = vunpack.c.l.b16 %v66
  %v207 = vunpack.c.l.b16 %v67
  %v208 = vunpack.c.l.b16 %v68
  %v209 = vunpack.c.l.b16 %v69
  %v210 = vunpack.c.l.b16 %v70
  %v211 = vunpack.c.l.b16 %v71
  %v212 = vunpack.c.l.b16 %v72
  %v213 = vunpack.c.l.b16 %v73
  %v214 = vunpack.c.l.b16 %v74
  %v215 = vunpack.c.l.b16 %v75
  %v216 = vunpack.c.l.b16 %v76
  %v217 = vunpack.c.l.b16 %v77
  %v218 = vunpack.c.l.b16 %v78
  %v219 = vunpack.c.l.b16 %v79
  %v220 = vunpack.c.l.b16 %v80
  %v221 = vpack.c.b16 %v158, %v157
  %v222 = vpack.c.b16 %v160, %v159
  %v223 = vpack.c.b16 %v162, %v161
  %v224 = vpack.c.b16 %v164, %v163
  %v225 = vpack.c.b16 %v166, %v165
  %v226 = vpack.c.b16 %v168, %v167
  %v227 = vpack.c.b16 %v170, %v169
  %v228 = vpack.c.b16 %v172, %v171
  %v229 = vpack.c.b16 %v174, %v173
  %v230 = vpack.c.b16 %v176, %v175
  %v231 = vpack.c.b16 %v178, %v177
  %v232 = vpack.c.b16 %v180, %v179
  %v233 = vpack.c.b16 %v182, %v181
  %v234 = vpack.c.b16 %v184, %v183
  %v235 = vpack.c.b16 %v186, %v185
  %v236 = vpack.c.b16 %v188, %v187
  %v237 = vpack.c.b16 %v190, %v189
  %v238 = vpack.c.b16 %v192, %v191
  %v239 = vpack.c.b16 %v194, %v193
  %v240 = vpack.c.b16 %v196, %v195
  %v241 = vpack.c.b16 %v198, %v197
  %v242 = vpack.c.b16 %v200, %v199
  %v243 = vpack.c.b16 %v202, %v201
  %v244 = vpack.c.b16 %v204, %v203
  %v245 = vpack.c.b16 %v206, %v205
  %v246 = vpack.c.b16 %v208, %v207
  %v247 = vpack.c.b16 %v210, %v209
  %v248 = vpack.c.b16 %v212, %v211
  %v249 = vpack.c.b16 %v214, %v213
  %v250 = vpack.c.b16 %v216, %v215
  %v251 = vpack.c.b16 %v218, %v217
  %v252 = vpack.c.b16 %v220, %v219
  %v258 = vunpack.c.l.b16 %v81
  %v259 = vunpack.c.l.b16 %v82
  %v260 = vunpack.c.l.b16 %v83
  %v261 = vunpack.c.l.b16 %v84
  %v262 = vunpack.c.l.b16 %v85
  %v263 = vpack.c.b16 %v259, %v258
  %v264 = vpack.c.b16 %v261, %v260
  %v265 = vpack.c.b16 %v262, %v262
  %vm268 = vcmask 293888
  %v270 = vsel %vm268, %v221, 0
  %v273 = vsel %vm268, %v222, 0
  %v276 = vsel %vm268, %v223, 0
  %v279 = vsel %vm268, %v224, 0
  %v282 = vsel %vm268, %v225, 0
  %v285 = vsel %vm268, %v226, 0
  %v288 = vsel %vm268, %v227, 0
  %v291 = vsel %vm268, %v228, 0
  %v294 = vsel %vm268, %v229, 0
  %v297 = vsel %vm268, %v230, 0
  %v300 = vsel %vm268, %v231, 0
  %v303 = vsel %vm268, %v232, 0
  %v306 = vsel %vm268, %v233, 0
  %v309 = vsel %vm268, %v234, 0
  %v312 = vsel %vm268, %v235, 0
  %v315 = vsel %vm268, %v236, 0
  %v318 = vsel %vm268, %v237, 0
  %v321 = vsel %vm268, %v238, 0
  %v324 = vsel %vm268, %v239, 0
  %v327 = vsel %vm268, %v240, 0
  %v330 = vsel %vm268, %v241, 0
  %v333 = vsel %vm268, %v242, 0
  %v336 = vsel %vm268, %v243, 0
  %v339 = vsel %vm268, %v244, 0
  %v342 = vsel %vm268, %v245, 0
  %v345 = vsel %vm268, %v246, 0
  %v348 = vsel %vm268, %v247, 0
  %v351 = vsel %vm268, %v248, 0
  %v354 = vsel %vm268, %v249, 0
  %v357 = vsel %vm268, %v250, 0
  %v360 = vsel %vm268, %v251, 0
  %v363 = vsel %vm268, %v252, 0
  %vm365 = vcmask 1041408
  %v367 = vsel %vm365, %v265, 0
  %369 = vmatprep.subr.bf16.mxu0 0
  %370 = vmatpush1.bf16.msra.mxu0 0
  %371 = vmatprep.subr.bf16.mxu0 0
  %372 = vmatpush1.bf16.msra.mxu0 0
  %373 = vmatprep.subr.bf16.mxu0 0
  %374 = vmatpush1.bf16.msra.mxu0 0
  %375 = vmatprep.subr.bf16.mxu0 0
  %376 = vmatpush1.bf16.msra.mxu0 0
  %377 = vmatprep.subr.bf16.mxu0 0
  %378 = vmatpush1.bf16.msra.mxu0 0
  %379 = vmatprep.subr.bf16.mxu0 0
  %380 = vmatpush1.bf16.msra.mxu0 %v367
  %381 = vmatprep.subr.bf16.mxu0 0
  %382 = vmatpush1.bf16.msra.mxu0 %v264
  %383 = vmatprep.subr.bf16.mxu0 0
  %384 = vmatpush1.bf16.msra.mxu0 %v263
  %385 = vmatprep.subr.bf16.mxu0 0
  %386 = vmatpush2.bf16.msra.mxu0 0
  %387 = vmatprep.subr.bf16.mxu0 0
  %388 = vmatpush2.bf16.msra.mxu0 0
  %389 = vmatprep.subr.bf16.mxu0 0
  %390 = vmatpush2.bf16.msra.mxu0 0
  %391 = vmatprep.subr.bf16.mxu0 0
  %392 = vmatpush2.bf16.msra.mxu0 0
  %393 = vmatprep.subr.bf16.mxu0 0
  %394 = vmatpush2.bf16.msra.mxu0 0
  %395 = vmatprep.subr.bf16.mxu0 0
  %396 = vmatpush2.bf16.msra.mxu0 0
  %397 = vmatprep.subr.bf16.mxu0 0
  %398 = vmatpush2.bf16.msra.mxu0 0
  %399 = vmatprep.subr.bf16.mxu0 0
  %400 = vmatpush2.bf16.msra.mxu0 0
  %401 = vmatprep.mubr.bf16.mxu0 0
  %402 = vmatmul.mubr.bf16.gmra.mxu0 %v270
  %v403 = vpop.f32.mrf.mxu0
  %v404 = vadd.f32 %v91, %v403
  %v405 = vpop.f32.mrf.mxu0
  %v406 = vpop.f32.mrf.mxu0
  %v407 = vadd.f32 %v91, %v406
  %v408 = vpop.f32.mrf.mxu0
  %409 = vmatprep.mubr.bf16.mxu0 0
  %410 = vmatmul.mubr.bf16.gmra.mxu0 %v273
  %v411 = vpop.f32.mrf.mxu0
  %v412 = vadd.f32 %v91, %v411
  %v413 = vpop.f32.mrf.mxu0
  %v414 = vpop.f32.mrf.mxu0
  %v415 = vadd.f32 %v91, %v414
  %v416 = vpop.f32.mrf.mxu0
  %417 = vmatprep.mubr.bf16.mxu0 0
  %418 = vmatmul.mubr.bf16.gmra.mxu0 %v276
  %v419 = vpop.f32.mrf.mxu0
  %v420 = vadd.f32 %v91, %v419
  %v421 = vpop.f32.mrf.mxu0
  %v422 = vpop.f32.mrf.mxu0
  %v423 = vadd.f32 %v91, %v422
  %v424 = vpop.f32.mrf.mxu0
  %425 = vmatprep.mubr.bf16.mxu0 0
  %426 = vmatmul.mubr.bf16.gmra.mxu0 %v279
  %v427 = vpop.f32.mrf.mxu0
  %v428 = vadd.f32 %v91, %v427
  %v429 = vpop.f32.mrf.mxu0
  %v430 = vpop.f32.mrf.mxu0
  %v431 = vadd.f32 %v91, %v430
  %v432 = vpop.f32.mrf.mxu0
  %433 = vmatprep.mubr.bf16.mxu0 0
  %434 = vmatmul.mubr.bf16.gmra.mxu0 %v282
  %v435 = vpop.f32.mrf.mxu0
  %v436 = vadd.f32 %v91, %v435
  %v437 = vpop.f32.mrf.mxu0
  %v438 = vpop.f32.mrf.mxu0
  %v439 = vadd.f32 %v91, %v438
  %v440 = vpop.f32.mrf.mxu0
  %441 = vmatprep.mubr.bf16.mxu0 0
  %442 = vmatmul.mubr.bf16.gmra.mxu0 %v285
  %v443 = vpop.f32.mrf.mxu0
  %v444 = vadd.f32 %v91, %v443
  %v445 = vpop.f32.mrf.mxu0
  %v446 = vpop.f32.mrf.mxu0
  %v447 = vadd.f32 %v91, %v446
  %v448 = vpop.f32.mrf.mxu0
  %449 = vmatprep.mubr.bf16.mxu0 0
  %450 = vmatmul.mubr.bf16.gmra.mxu0 %v288
  %v451 = vpop.f32.mrf.mxu0
  %v452 = vadd.f32 %v91, %v451
  %v453 = vpop.f32.mrf.mxu0
  %v454 = vpop.f32.mrf.mxu0
  %v455 = vadd.f32 %v91, %v454
  %v456 = vpop.f32.mrf.mxu0
  %457 = vmatprep.mubr.bf16.mxu0 0
  %458 = vmatmul.mubr.bf16.gmra.mxu0 %v291
  %v459 = vpop.f32.mrf.mxu0
  %v460 = vadd.f32 %v91, %v459
  %v461 = vpop.f32.mrf.mxu0
  %v462 = vpop.f32.mrf.mxu0
  %v463 = vadd.f32 %v91, %v462
  %v464 = vpop.f32.mrf.mxu0
  %465 = vmatprep.mubr.bf16.mxu0 0
  %466 = vmatmul.mubr.bf16.gmra.mxu0 %v294
  %v467 = vpop.f32.mrf.mxu0
  %v468 = vadd.f32 %v91, %v467
  %v469 = vpop.f32.mrf.mxu0
  %v470 = vpop.f32.mrf.mxu0
  %v471 = vadd.f32 %v91, %v470
  %v472 = vpop.f32.mrf.mxu0
  %473 = vmatprep.mubr.bf16.mxu0 0
  %474 = vmatmul.mubr.bf16.gmra.mxu0 %v297
  %v475 = vpop.f32.mrf.mxu0
  %v476 = vadd.f32 %v91, %v475
  %v477 = vpop.f32.mrf.mxu0
  %v478 = vpop.f32.mrf.mxu0
  %v479 = vadd.f32 %v91, %v478
  %v480 = vpop.f32.mrf.mxu0
  %481 = vmatprep.mubr.bf16.mxu0 0
  %482 = vmatmul.mubr.bf16.gmra.mxu0 %v300
  %v483 = vpop.f32.mrf.mxu0
  %v484 = vadd.f32 %v91, %v483
  %v485 = vpop.f32.mrf.mxu0
  %v486 = vpop.f32.mrf.mxu0
  %v487 = vadd.f32 %v91, %v486
  %v488 = vpop.f32.mrf.mxu0
  %489 = vmatprep.mubr.bf16.mxu0 0
  %490 = vmatmul.mubr.bf16.gmra.mxu0 %v303
  %v491 = vpop.f32.mrf.mxu0
  %v492 = vadd.f32 %v91, %v491
  %v493 = vpop.f32.mrf.mxu0
  %v494 = vpop.f32.mrf.mxu0
  %v495 = vadd.f32 %v91, %v494
  %v496 = vpop.f32.mrf.mxu0
  %497 = vmatprep.mubr.bf16.mxu0 0
  %498 = vmatmul.mubr.bf16.gmra.mxu0 %v306
  %v499 = vpop.f32.mrf.mxu0
  %v500 = vadd.f32 %v91, %v499
  %v501 = vpop.f32.mrf.mxu0
  %v502 = vpop.f32.mrf.mxu0
  %v503 = vadd.f32 %v91, %v502
  %v504 = vpop.f32.mrf.mxu0
  %505 = vmatprep.mubr.bf16.mxu0 0
  %506 = vmatmul.mubr.bf16.gmra.mxu0 %v309
  %v507 = vpop.f32.mrf.mxu0
  %v508 = vadd.f32 %v91, %v507
  %v509 = vpop.f32.mrf.mxu0
  %v510 = vpop.f32.mrf.mxu0
  %v511 = vadd.f32 %v91, %v510
  %v512 = vpop.f32.mrf.mxu0
  %513 = vmatprep.mubr.bf16.mxu0 0
  %514 = vmatmul.mubr.bf16.gmra.mxu0 %v312
  %v515 = vpop.f32.mrf.mxu0
  %v516 = vadd.f32 %v91, %v515
  %v517 = vpop.f32.mrf.mxu0
  %v518 = vpop.f32.mrf.mxu0
  %v519 = vadd.f32 %v91, %v518
  %v520 = vpop.f32.mrf.mxu0
  %521 = vmatprep.mubr.bf16.mxu0 0
  %522 = vmatmul.mubr.bf16.gmra.mxu0 %v315
  %v523 = vpop.f32.mrf.mxu0
  %v524 = vadd.f32 %v91, %v523
  %v525 = vpop.f32.mrf.mxu0
  %v526 = vpop.f32.mrf.mxu0
  %v527 = vadd.f32 %v91, %v526
  %v528 = vpop.f32.mrf.mxu0
  %529 = vmatprep.mubr.bf16.mxu0 0
  %530 = vmatmul.mubr.bf16.gmra.mxu0 %v318
  %v531 = vpop.f32.mrf.mxu0
  %v532 = vadd.f32 %v91, %v531
  %v533 = vpop.f32.mrf.mxu0
  %v534 = vpop.f32.mrf.mxu0
  %v535 = vadd.f32 %v91, %v534
  %v536 = vpop.f32.mrf.mxu0
  %537 = vmatprep.mubr.bf16.mxu0 0
  %538 = vmatmul.mubr.bf16.gmra.mxu0 %v321
  %v539 = vpop.f32.mrf.mxu0
  %v540 = vadd.f32 %v91, %v539
  %v541 = vpop.f32.mrf.mxu0
  %v542 = vpop.f32.mrf.mxu0
  %v543 = vadd.f32 %v91, %v542
  %v544 = vpop.f32.mrf.mxu0
  %545 = vmatprep.mubr.bf16.mxu0 0
  %546 = vmatmul.mubr.bf16.gmra.mxu0 %v324
  %v547 = vpop.f32.mrf.mxu0
  %v548 = vadd.f32 %v91, %v547
  %v549 = vpop.f32.mrf.mxu0
  %v550 = vpop.f32.mrf.mxu0
  %v551 = vadd.f32 %v91, %v550
  %v552 = vpop.f32.mrf.mxu0
  %553 = vmatprep.mubr.bf16.mxu0 0
  %554 = vmatmul.mubr.bf16.gmra.mxu0 %v327
  %v555 = vpop.f32.mrf.mxu0
  %v556 = vadd.f32 %v91, %v555
  %v557 = vpop.f32.mrf.mxu0
  %v558 = vpop.f32.mrf.mxu0
  %v559 = vadd.f32 %v91, %v558
  %v560 = vpop.f32.mrf.mxu0
  %561 = vmatprep.mubr.bf16.mxu0 0
  %562 = vmatmul.mubr.bf16.gmra.mxu0 %v330
  %v563 = vpop.f32.mrf.mxu0
  %v564 = vadd.f32 %v91, %v563
  %v565 = vpop.f32.mrf.mxu0
  %v566 = vpop.f32.mrf.mxu0
  %v567 = vadd.f32 %v91, %v566
  %v568 = vpop.f32.mrf.mxu0
  %569 = vmatprep.mubr.bf16.mxu0 0
  %570 = vmatmul.mubr.bf16.gmra.mxu0 %v333
  %v571 = vpop.f32.mrf.mxu0
  %v572 = vadd.f32 %v91, %v571
  %v573 = vpop.f32.mrf.mxu0
  %v574 = vpop.f32.mrf.mxu0
  %v575 = vadd.f32 %v91, %v574
  %v576 = vpop.f32.mrf.mxu0
  %577 = vmatprep.mubr.bf16.mxu0 0
  %578 = vmatmul.mubr.bf16.gmra.mxu0 %v336
  %v579 = vpop.f32.mrf.mxu0
  %v580 = vadd.f32 %v91, %v579
  %v581 = vpop.f32.mrf.mxu0
  %v582 = vpop.f32.mrf.mxu0
  %v583 = vadd.f32 %v91, %v582
  %v584 = vpop.f32.mrf.mxu0
  %585 = vmatprep.mubr.bf16.mxu0 0
  %586 = vmatmul.mubr.bf16.gmra.mxu0 %v339
  %v587 = vpop.f32.mrf.mxu0
  %v588 = vadd.f32 %v91, %v587
  %v589 = vpop.f32.mrf.mxu0
  %v590 = vpop.f32.mrf.mxu0
  %v591 = vadd.f32 %v91, %v590
  %v592 = vpop.f32.mrf.mxu0
  %593 = vmatprep.mubr.bf16.mxu0 0
  %594 = vmatmul.mubr.bf16.gmra.mxu0 %v342
  %v595 = vpop.f32.mrf.mxu0
  %v596 = vadd.f32 %v91, %v595
  %v597 = vpop.f32.mrf.mxu0
  %v598 = vpop.f32.mrf.mxu0
  %v599 = vadd.f32 %v91, %v598
  %v600 = vpop.f32.mrf.mxu0
  %601 = vmatprep.mubr.bf16.mxu0 0
  %602 = vmatmul.mubr.bf16.gmra.mxu0 %v345
  %v603 = vpop.f32.mrf.mxu0
  %v604 = vadd.f32 %v91, %v603
  %v605 = vpop.f32.mrf.mxu0
  %v606 = vpop.f32.mrf.mxu0
  %v607 = vadd.f32 %v91, %v606
  %v608 = vpop.f32.mrf.mxu0
  %609 = vmatprep.mubr.bf16.mxu0 0
  %610 = vmatmul.mubr.bf16.gmra.mxu0 %v348
  %v611 = vpop.f32.mrf.mxu0
  %v612 = vadd.f32 %v91, %v611
  %v613 = vpop.f32.mrf.mxu0
  %v614 = vpop.f32.mrf.mxu0
  %v615 = vadd.f32 %v91, %v614
  %v616 = vpop.f32.mrf.mxu0
  %617 = vmatprep.mubr.bf16.mxu0 0
  %618 = vmatmul.mubr.bf16.gmra.mxu0 %v351
  %v619 = vpop.f32.mrf.mxu0
  %v620 = vadd.f32 %v91, %v619
  %v621 = vpop.f32.mrf.mxu0
  %v622 = vpop.f32.mrf.mxu0
  %v623 = vadd.f32 %v91, %v622
  %v624 = vpop.f32.mrf.mxu0
  %625 = vmatprep.mubr.bf16.mxu0 0
  %626 = vmatmul.mubr.bf16.gmra.mxu0 %v354
  %v627 = vpop.f32.mrf.mxu0
  %v628 = vadd.f32 %v91, %v627
  %v629 = vpop.f32.mrf.mxu0
  %v630 = vpop.f32.mrf.mxu0
  %v631 = vadd.f32 %v91, %v630
  %v632 = vpop.f32.mrf.mxu0
  %633 = vmatprep.mubr.bf16.mxu0 0
  %634 = vmatmul.mubr.bf16.gmra.mxu0 %v357
  %v635 = vpop.f32.mrf.mxu0
  %v636 = vadd.f32 %v91, %v635
  %v637 = vpop.f32.mrf.mxu0
  %v638 = vpop.f32.mrf.mxu0
  %v639 = vadd.f32 %v91, %v638
  %v640 = vpop.f32.mrf.mxu0
  %641 = vmatprep.mubr.bf16.mxu0 0
  %642 = vmatmul.mubr.bf16.gmra.mxu0 %v360
  %v643 = vpop.f32.mrf.mxu0
  %v644 = vadd.f32 %v91, %v643
  %v645 = vpop.f32.mrf.mxu0
  %v646 = vpop.f32.mrf.mxu0
  %v647 = vadd.f32 %v91, %v646
  %v648 = vpop.f32.mrf.mxu0
  %649 = vmatprep.mubr.bf16.mxu0 0
  %650 = vmatmul.mubr.bf16.gmra.mxu0 %v363
  %v651 = vpop.f32.mrf.mxu0
  %v652 = vadd.f32 %v91, %v651
  %v653 = vpop.f32.mrf.mxu0
  %v654 = vpop.f32.mrf.mxu0
  %v655 = vadd.f32 %v91, %v654
  %v656 = vpop.f32.mrf.mxu0
  %657 = vdwg.mxu0
  %v658 = vlaneseq
  %v659 = vshrl.u32 %v658, 7
  %v660 = vadd.s32 %v659, 8
  %v661 = vadd.s32 %v659, 16
  %v662 = vadd.s32 %v659, 24
  %v663 = vadd.s32 %v659, 32
  %v664 = vadd.s32 %v659, 40
  %v665 = vadd.s32 %v659, 48
  %v666 = vadd.s32 %v659, 56
  %v667 = vadd.s32 %v659, 64
  %v668 = vadd.s32 %v659, 72
  %v669 = vadd.s32 %v659, 80
  %v670 = vadd.s32 %v659, 88
  %v671 = vadd.s32 %v659, 96
  %v672 = vadd.s32 %v659, 104
  %v673 = vadd.s32 %v659, 112
  %v674 = vadd.s32 %v659, 120
  %v675 = vadd.s32 %v659, 128
  %v676 = vadd.s32 %v659, 136
  %v677 = vadd.s32 %v659, 144
  %v678 = vadd.s32 %v659, 152
  %v679 = vadd.s32 %v659, 160
  %v680 = vadd.s32 %v659, 168
  %v681 = vadd.s32 %v659, 176
  %v682 = vadd.s32 %v659, 184
  %v683 = vadd.s32 %v659, 192
  %v684 = vadd.s32 %v659, 200
  %v685 = vadd.s32 %v659, 208
  %v686 = vadd.s32 %v659, 216
  %v687 = vadd.s32 %v659, 224
  %v688 = vadd.s32 %v659, 232
  %v689 = vadd.s32 %v659, 240
  %v690 = vadd.s32 %v659, 248
  %v691 = vadd.s32 %v659, 256
  %v692 = vadd.s32 %v659, 264
  %v693 = vadd.s32 %v659, 272
  %v694 = vadd.s32 %v659, 280
  %v695 = vadd.s32 %v659, 288
  %v696 = vadd.s32 %v659, 296
  %v697 = vadd.s32 %v659, 304
  %v698 = vadd.s32 %v659, 312
  %v699 = vadd.s32 %v659, 320
  %v700 = vadd.s32 %v659, 328
  %v701 = vadd.s32 %v659, 336
  %v702 = vadd.s32 %v659, 344
  %v703 = vadd.s32 %v659, 352
  %v704 = vadd.s32 %v659, 360
  %v705 = vadd.s32 %v659, 368
  %v706 = vadd.s32 %v659, 376
  %v707 = vadd.s32 %v659, 384
  %v708 = vadd.s32 %v659, 392
  %v709 = vadd.s32 %v659, 400
  %v710 = vadd.s32 %v659, 408
  %v711 = vadd.s32 %v659, 416
  %v712 = vadd.s32 %v659, 424
  %v713 = vadd.s32 %v659, 432
  %v714 = vadd.s32 %v659, 440
  %v715 = vadd.s32 %v659, 448
  %v716 = vadd.s32 %v659, 456
  %v717 = vadd.s32 %v659, 464
  %v718 = vadd.s32 %v659, 472
  %v719 = vadd.s32 %v659, 480
  %v720 = vadd.s32 %v659, 488
  %v721 = vadd.s32 %v659, 496
  %v722 = vadd.s32 %v659, 504
  %s723 = smul.u32 0, 512
  %v724 = vstv %s723
  %v725 = vadd.s32 %v659, %v724
  %v726 = vadd.s32 %v660, %v724
  %v727 = vadd.s32 %v661, %v724
  %v728 = vadd.s32 %v662, %v724
  %v729 = vadd.s32 %v663, %v724
  %v730 = vadd.s32 %v664, %v724
  %v731 = vadd.s32 %v665, %v724
  %v732 = vadd.s32 %v666, %v724
  %v733 = vadd.s32 %v667, %v724
  %v734 = vadd.s32 %v668, %v724
  %v735 = vadd.s32 %v669, %v724
  %v736 = vadd.s32 %v670, %v724
  %v737 = vadd.s32 %v671, %v724
  %v738 = vadd.s32 %v672, %v724
  %v739 = vadd.s32 %v673, %v724
  %v740 = vadd.s32 %v674, %v724
  %v741 = vadd.s32 %v675, %v724
  %v742 = vadd.s32 %v676, %v724
  %v743 = vadd.s32 %v677, %v724
  %v744 = vadd.s32 %v678, %v724
  %v745 = vadd.s32 %v679, %v724
  %v746 = vadd.s32 %v680, %v724
  %v747 = vadd.s32 %v681, %v724
  %v748 = vadd.s32 %v682, %v724
  %v749 = vadd.s32 %v683, %v724
  %v750 = vadd.s32 %v684, %v724
  %v751 = vadd.s32 %v685, %v724
  %v752 = vadd.s32 %v686, %v724
  %v753 = vadd.s32 %v687, %v724
  %v754 = vadd.s32 %v688, %v724
  %v755 = vadd.s32 %v689, %v724
  %v756 = vadd.s32 %v690, %v724
  %v757 = vadd.s32 %v691, %v724
  %v758 = vadd.s32 %v692, %v724
  %v759 = vadd.s32 %v693, %v724
  %v760 = vadd.s32 %v694, %v724
  %v761 = vadd.s32 %v695, %v724
  %v762 = vadd.s32 %v696, %v724
  %v763 = vadd.s32 %v697, %v724
  %v764 = vadd.s32 %v698, %v724
  %v765 = vadd.s32 %v699, %v724
  %v766 = vadd.s32 %v700, %v724
  %v767 = vadd.s32 %v701, %v724
  %v768 = vadd.s32 %v702, %v724
  %v769 = vadd.s32 %v703, %v724
  %v770 = vadd.s32 %v704, %v724
  %v771 = vadd.s32 %v705, %v724
  %v772 = vadd.s32 %v706, %v724
  %v773 = vadd.s32 %v707, %v724
  %v774 = vadd.s32 %v708, %v724
  %v775 = vadd.s32 %v709, %v724
  %v776 = vadd.s32 %v710, %v724
  %v777 = vadd.s32 %v711, %v724
  %v778 = vadd.s32 %v712, %v724
  %v779 = vadd.s32 %v713, %v724
  %v780 = vadd.s32 %v714, %v724
  %v781 = vadd.s32 %v715, %v724
  %v782 = vadd.s32 %v716, %v724
  %v783 = vadd.s32 %v717, %v724
  %v784 = vadd.s32 %v718, %v724
  %v785 = vadd.s32 %v719, %v724
  %v786 = vadd.s32 %v720, %v724
  %v787 = vadd.s32 %v721, %v724
  %v788 = vadd.s32 %v722, %v724
  %vm789 = vcmp.lt.s32.totalorder %v725, 512
  %vm790 = vcmp.lt.s32.totalorder %v726, 512
  %vm791 = vcmp.lt.s32.totalorder %v727, 512
  %vm792 = vcmp.lt.s32.totalorder %v728, 512
  %vm793 = vcmp.lt.s32.totalorder %v729, 512
  %vm794 = vcmp.lt.s32.totalorder %v730, 512
  %vm795 = vcmp.lt.s32.totalorder %v731, 512
  %vm796 = vcmp.lt.s32.totalorder %v732, 512
  %vm797 = vcmp.lt.s32.totalorder %v733, 512
  %vm798 = vcmp.lt.s32.totalorder %v734, 512
  %vm799 = vcmp.lt.s32.totalorder %v735, 512
  %vm800 = vcmp.lt.s32.totalorder %v736, 512
  %vm801 = vcmp.lt.s32.totalorder %v737, 512
  %vm802 = vcmp.lt.s32.totalorder %v738, 512
  %vm803 = vcmp.lt.s32.totalorder %v739, 512
  %vm804 = vcmp.lt.s32.totalorder %v740, 512
  %vm805 = vcmp.lt.s32.totalorder %v741, 512
  %vm806 = vcmp.lt.s32.totalorder %v742, 512
  %vm807 = vcmp.lt.s32.totalorder %v743, 512
  %vm808 = vcmp.lt.s32.totalorder %v744, 512
  %vm809 = vcmp.lt.s32.totalorder %v745, 512
  %vm810 = vcmp.lt.s32.totalorder %v746, 512
  %vm811 = vcmp.lt.s32.totalorder %v747, 512
  %vm812 = vcmp.lt.s32.totalorder %v748, 512
  %vm813 = vcmp.lt.s32.totalorder %v749, 512
  %vm814 = vcmp.lt.s32.totalorder %v750, 512
  %vm815 = vcmp.lt.s32.totalorder %v751, 512
  %vm816 = vcmp.lt.s32.totalorder %v752, 512
  %vm817 = vcmp.lt.s32.totalorder %v753, 512
  %vm818 = vcmp.lt.s32.totalorder %v754, 512
  %vm819 = vcmp.lt.s32.totalorder %v755, 512
  %vm820 = vcmp.lt.s32.totalorder %v756, 512
  %vm821 = vcmp.lt.s32.totalorder %v757, 512
  %vm822 = vcmp.lt.s32.totalorder %v758, 512
  %vm823 = vcmp.lt.s32.totalorder %v759, 512
  %vm824 = vcmp.lt.s32.totalorder %v760, 512
  %vm825 = vcmp.lt.s32.totalorder %v761, 512
  %vm826 = vcmp.lt.s32.totalorder %v762, 512
  %vm827 = vcmp.lt.s32.totalorder %v763, 512
  %vm828 = vcmp.lt.s32.totalorder %v764, 512
  %vm829 = vcmp.lt.s32.totalorder %v765, 512
  %vm830 = vcmp.lt.s32.totalorder %v766, 512
  %vm831 = vcmp.lt.s32.totalorder %v767, 512
  %vm832 = vcmp.lt.s32.totalorder %v768, 512
  %vm833 = vcmp.lt.s32.totalorder %v769, 512
  %vm834 = vcmp.lt.s32.totalorder %v770, 512
  %vm835 = vcmp.lt.s32.totalorder %v771, 512
  %vm836 = vcmp.lt.s32.totalorder %v772, 512
  %vm837 = vcmp.lt.s32.totalorder %v773, 512
  %vm838 = vcmp.lt.s32.totalorder %v774, 512
  %vm839 = vcmp.lt.s32.totalorder %v775, 512
  %vm840 = vcmp.lt.s32.totalorder %v776, 512
  %vm841 = vcmp.lt.s32.totalorder %v777, 512
  %vm842 = vcmp.lt.s32.totalorder %v778, 512
  %vm843 = vcmp.lt.s32.totalorder %v779, 512
  %vm844 = vcmp.lt.s32.totalorder %v780, 512
  %vm845 = vcmp.lt.s32.totalorder %v781, 512
  %vm846 = vcmp.lt.s32.totalorder %v782, 512
  %vm847 = vcmp.lt.s32.totalorder %v783, 512
  %vm848 = vcmp.lt.s32.totalorder %v784, 512
  %vm849 = vcmp.lt.s32.totalorder %v785, 512
  %vm850 = vcmp.lt.s32.totalorder %v786, 512
  %vm851 = vcmp.lt.s32.totalorder %v787, 512
  %vm852 = vcmp.lt.s32.totalorder %v788, 512
  %v853 = vsel %vm789, %v404, 0.0
  %v854 = vsel %vm790, %v407, 0.0
  %v855 = vsel %vm791, %v412, 0.0
  %v856 = vsel %vm792, %v415, 0.0
  %v857 = vsel %vm793, %v420, 0.0
  %v858 = vsel %vm794, %v423, 0.0
  %v859 = vsel %vm795, %v428, 0.0
  %v860 = vsel %vm796, %v431, 0.0
  %v861 = vsel %vm797, %v436, 0.0
  %v862 = vsel %vm798, %v439, 0.0
  %v863 = vsel %vm799, %v444, 0.0
  %v864 = vsel %vm800, %v447, 0.0
  %v865 = vsel %vm801, %v452, 0.0
  %v866 = vsel %vm802, %v455, 0.0
  %v867 = vsel %vm803, %v460, 0.0
  %v868 = vsel %vm804, %v463, 0.0
  %v869 = vsel %vm805, %v468, 0.0
  %v870 = vsel %vm806, %v471, 0.0
  %v871 = vsel %vm807, %v476, 0.0
  %v872 = vsel %vm808, %v479, 0.0
  %v873 = vsel %vm809, %v484, 0.0
  %v874 = vsel %vm810, %v487, 0.0
  %v875 = vsel %vm811, %v492, 0.0
  %v876 = vsel %vm812, %v495, 0.0
  %v877 = vsel %vm813, %v500, 0.0
  %v878 = vsel %vm814, %v503, 0.0
  %v879 = vsel %vm815, %v508, 0.0
  %v880 = vsel %vm816, %v511, 0.0
  %v881 = vsel %vm817, %v516, 0.0
  %v882 = vsel %vm818, %v519, 0.0
  %v883 = vsel %vm819, %v524, 0.0
  %v884 = vsel %vm820, %v527, 0.0
  %v885 = vsel %vm821, %v532, 0.0
  %v886 = vsel %vm822, %v535, 0.0
  %v887 = vsel %vm823, %v540, 0.0
  %v888 = vsel %vm824, %v543, 0.0
  %v889 = vsel %vm825, %v548, 0.0
  %v890 = vsel %vm826, %v551, 0.0
  %v891 = vsel %vm827, %v556, 0.0
  %v892 = vsel %vm828, %v559, 0.0
  %v893 = vsel %vm829, %v564, 0.0
  %v894 = vsel %vm830, %v567, 0.0
  %v895 = vsel %vm831, %v572, 0.0
  %v896 = vsel %vm832, %v575, 0.0
  %v897 = vsel %vm833, %v580, 0.0
  %v898 = vsel %vm834, %v583, 0.0
  %v899 = vsel %vm835, %v588, 0.0
  %v900 = vsel %vm836, %v591, 0.0
  %v901 = vsel %vm837, %v596, 0.0
  %v902 = vsel %vm838, %v599, 0.0
  %v903 = vsel %vm839, %v604, 0.0
  %v904 = vsel %vm840, %v607, 0.0
  %v905 = vsel %vm841, %v612, 0.0
  %v906 = vsel %vm842, %v615, 0.0
  %v907 = vsel %vm843, %v620, 0.0
  %v908 = vsel %vm844, %v623, 0.0
  %v909 = vsel %vm845, %v628, 0.0
  %v910 = vsel %vm846, %v631, 0.0
  %v911 = vsel %vm847, %v636, 0.0
  %v912 = vsel %vm848, %v639, 0.0
  %v913 = vsel %vm849, %v644, 0.0
  %v914 = vsel %vm850, %v647, 0.0
  %v915 = vsel %vm851, %v652, 0.0
  %v916 = vsel %vm852, %v655, 0.0
  %v917 = vadd.f32 %v853, %v854
  %v918 = vadd.f32 %v917, %v855
  %v919 = vadd.f32 %v918, %v856
  %v920 = vadd.f32 %v919, %v857
  %v921 = vadd.f32 %v920, %v858
  %v922 = vadd.f32 %v921, %v859
  %v923 = vadd.f32 %v922, %v860
  %v924 = vadd.f32 %v923, %v861
  %v925 = vadd.f32 %v924, %v862
  %v926 = vadd.f32 %v925, %v863
  %v927 = vadd.f32 %v926, %v864
  %v928 = vadd.f32 %v927, %v865
  %v929 = vadd.f32 %v928, %v866
  %v930 = vadd.f32 %v929, %v867
  %v931 = vadd.f32 %v930, %v868
  %v932 = vadd.f32 %v931, %v869
  %v933 = vadd.f32 %v932, %v870
  %v934 = vadd.f32 %v933, %v871
  %v935 = vadd.f32 %v934, %v872
  %v936 = vadd.f32 %v935, %v873
  %v937 = vadd.f32 %v936, %v874
  %v938 = vadd.f32 %v937, %v875
  %v939 = vadd.f32 %v938, %v876
  %v940 = vadd.f32 %v939, %v877
  %v941 = vadd.f32 %v940, %v878
  %v942 = vadd.f32 %v941, %v879
  %v943 = vadd.f32 %v942, %v880
  %v944 = vadd.f32 %v943, %v881
  %v945 = vadd.f32 %v944, %v882
  %v946 = vadd.f32 %v945, %v883
  %v947 = vadd.f32 %v946, %v884
  %v948 = vadd.f32 %v947, %v885
  %v949 = vadd.f32 %v948, %v886
  %v950 = vadd.f32 %v949, %v887
  %v951 = vadd.f32 %v950, %v888
  %v952 = vadd.f32 %v951, %v889
  %v953 = vadd.f32 %v952, %v890
  %v954 = vadd.f32 %v953, %v891
  %v955 = vadd.f32 %v954, %v892
  %v956 = vadd.f32 %v955, %v893
  %v957 = vadd.f32 %v956, %v894
  %v958 = vadd.f32 %v957, %v895
  %v959 = vadd.f32 %v958, %v896
  %v960 = vadd.f32 %v959, %v897
  %v961 = vadd.f32 %v960, %v898
  %v962 = vadd.f32 %v961, %v899
  %v963 = vadd.f32 %v962, %v900
  %v964 = vadd.f32 %v963, %v901
  %v965 = vadd.f32 %v964, %v902
  %v966 = vadd.f32 %v965, %v903
  %v967 = vadd.f32 %v966, %v904
  %v968 = vadd.f32 %v967, %v905
  %v969 = vadd.f32 %v968, %v906
  %v970 = vadd.f32 %v969, %v907
  %v971 = vadd.f32 %v970, %v908
  %v972 = vadd.f32 %v971, %v909
  %v973 = vadd.f32 %v972, %v910
  %v974 = vadd.f32 %v973, %v911
  %v975 = vadd.f32 %v974, %v912
  %v976 = vadd.f32 %v975, %v913
  %v977 = vadd.f32 %v976, %v914
  %v978 = vadd.f32 %v977, %v915
  %v979 = vadd.f32 %v978, %v916
  %v980 = vrot.slane %v979, 4
  %v981 = vadd.f32 %v979, %v980
  %v982 = vrot.slane %v981, 2
  %v983 = vadd.f32 %v981, %v982
  %v984 = vrot.slane %v983, 1
  %v985 = vadd.f32 %v983, %v984
  %v986 = vmul.f32 %v853, %v853
  %v987 = vmul.f32 %v854, %v854
  %v988 = vmul.f32 %v855, %v855
  %v989 = vmul.f32 %v856, %v856
  %v990 = vmul.f32 %v857, %v857
  %v991 = vmul.f32 %v858, %v858
  %v992 = vmul.f32 %v859, %v859
  %v993 = vmul.f32 %v860, %v860
  %v994 = vmul.f32 %v861, %v861
  %v995 = vmul.f32 %v862, %v862
  %v996 = vmul.f32 %v863, %v863
  %v997 = vmul.f32 %v864, %v864
  %v998 = vmul.f32 %v865, %v865
  %v999 = vmul.f32 %v866, %v866
  %v1000 = vmul.f32 %v867, %v867
  %v1001 = vmul.f32 %v868, %v868
  %v1002 = vmul.f32 %v869, %v869
  %v1003 = vmul.f32 %v870, %v870
  %v1004 = vmul.f32 %v871, %v871
  %v1005 = vmul.f32 %v872, %v872
  %v1006 = vmul.f32 %v873, %v873
  %v1007 = vmul.f32 %v874, %v874
  %v1008 = vmul.f32 %v875, %v875
  %v1009 = vmul.f32 %v876, %v876
  %v1010 = vmul.f32 %v877, %v877
  %v1011 = vmul.f32 %v878, %v878
  %v1012 = vmul.f32 %v879, %v879
  %v1013 = vmul.f32 %v880, %v880
  %v1014 = vmul.f32 %v881, %v881
  %v1015 = vmul.f32 %v882, %v882
  %v1016 = vmul.f32 %v883, %v883
  %v1017 = vmul.f32 %v884, %v884
  %v1018 = vmul.f32 %v885, %v885
  %v1019 = vmul.f32 %v886, %v886
  %v1020 = vmul.f32 %v887, %v887
  %v1021 = vmul.f32 %v888, %v888
  %v1022 = vmul.f32 %v889, %v889
  %v1023 = vmul.f32 %v890, %v890
  %v1024 = vmul.f32 %v891, %v891
  %v1025 = vmul.f32 %v892, %v892
  %v1026 = vmul.f32 %v893, %v893
  %v1027 = vmul.f32 %v894, %v894
  %v1028 = vmul.f32 %v895, %v895
  %v1029 = vmul.f32 %v896, %v896
  %v1030 = vmul.f32 %v897, %v897
  %v1031 = vmul.f32 %v898, %v898
  %v1032 = vmul.f32 %v899, %v899
  %v1033 = vmul.f32 %v900, %v900
  %v1034 = vmul.f32 %v901, %v901
  %v1035 = vmul.f32 %v902, %v902
  %v1036 = vmul.f32 %v903, %v903
  %v1037 = vmul.f32 %v904, %v904
  %v1038 = vmul.f32 %v905, %v905
  %v1039 = vmul.f32 %v906, %v906
  %v1040 = vmul.f32 %v907, %v907
  %v1041 = vmul.f32 %v908, %v908
  %v1042 = vmul.f32 %v909, %v909
  %v1043 = vmul.f32 %v910, %v910
  %v1044 = vmul.f32 %v911, %v911
  %v1045 = vmul.f32 %v912, %v912
  %v1046 = vmul.f32 %v913, %v913
  %v1047 = vmul.f32 %v914, %v914
  %v1048 = vmul.f32 %v915, %v915
  %v1049 = vmul.f32 %v916, %v916
  %v1050 = vadd.f32 %v986, %v987
  %v1051 = vadd.f32 %v1050, %v988
  %v1052 = vadd.f32 %v1051, %v989
  %v1053 = vadd.f32 %v1052, %v990
  %v1054 = vadd.f32 %v1053, %v991
  %v1055 = vadd.f32 %v1054, %v992
  %v1056 = vadd.f32 %v1055, %v993
  %v1057 = vadd.f32 %v1056, %v994
  %v1058 = vadd.f32 %v1057, %v995
  %v1059 = vadd.f32 %v1058, %v996
  %v1060 = vadd.f32 %v1059, %v997
  %v1061 = vadd.f32 %v1060, %v998
  %v1062 = vadd.f32 %v1061, %v999
  %v1063 = vadd.f32 %v1062, %v1000
  %v1064 = vadd.f32 %v1063, %v1001
  %v1065 = vadd.f32 %v1064, %v1002
  %v1066 = vadd.f32 %v1065, %v1003
  %v1067 = vadd.f32 %v1066, %v1004
  %v1068 = vadd.f32 %v1067, %v1005
  %v1069 = vadd.f32 %v1068, %v1006
  %v1070 = vadd.f32 %v1069, %v1007
  %v1071 = vadd.f32 %v1070, %v1008
  %v1072 = vadd.f32 %v1071, %v1009
  %v1073 = vadd.f32 %v1072, %v1010
  %v1074 = vadd.f32 %v1073, %v1011
  %v1075 = vadd.f32 %v1074, %v1012
  %v1076 = vadd.f32 %v1075, %v1013
  %v1077 = vadd.f32 %v1076, %v1014
  %v1078 = vadd.f32 %v1077, %v1015
  %v1079 = vadd.f32 %v1078, %v1016
  %v1080 = vadd.f32 %v1079, %v1017
  %v1081 = vadd.f32 %v1080, %v1018
  %v1082 = vadd.f32 %v1081, %v1019
  %v1083 = vadd.f32 %v1082, %v1020
  %v1084 = vadd.f32 %v1083, %v1021
  %v1085 = vadd.f32 %v1084, %v1022
  %v1086 = vadd.f32 %v1085, %v1023
  %v1087 = vadd.f32 %v1086, %v1024
  %v1088 = vadd.f32 %v1087, %v1025
  %v1089 = vadd.f32 %v1088, %v1026
  %v1090 = vadd.f32 %v1089, %v1027
  %v1091 = vadd.f32 %v1090, %v1028
  %v1092 = vadd.f32 %v1091, %v1029
  %v1093 = vadd.f32 %v1092, %v1030
  %v1094 = vadd.f32 %v1093, %v1031
  %v1095 = vadd.f32 %v1094, %v1032
  %v1096 = vadd.f32 %v1095, %v1033
  %v1097 = vadd.f32 %v1096, %v1034
  %v1098 = vadd.f32 %v1097, %v1035
  %v1099 = vadd.f32 %v1098, %v1036
  %v1100 = vadd.f32 %v1099, %v1037
  %v1101 = vadd.f32 %v1100, %v1038
  %v1102 = vadd.f32 %v1101, %v1039
  %v1103 = vadd.f32 %v1102, %v1040
  %v1104 = vadd.f32 %v1103, %v1041
  %v1105 = vadd.f32 %v1104, %v1042
  %v1106 = vadd.f32 %v1105, %v1043
  %v1107 = vadd.f32 %v1106, %v1044
  %v1108 = vadd.f32 %v1107, %v1045
  %v1109 = vadd.f32 %v1108, %v1046
  %v1110 = vadd.f32 %v1109, %v1047
  %v1111 = vadd.f32 %v1110, %v1048
  %v1112 = vadd.f32 %v1111, %v1049
  %v1113 = vrot.slane %v1112, 4
  %v1114 = vadd.f32 %v1112, %v1113
  %v1115 = vrot.slane %v1114, 2
  %v1116 = vadd.f32 %v1114, %v1115
  %v1117 = vrot.slane %v1116, 1
  %v1118 = vadd.f32 %v1116, %v1117
  %vm1119 = vcmask 1040384
  %v1120 = vsel %vm1119, %v985, %v1118
  %v1121 = vsel %vm365, %v1120, 0.0
  %1122 = vst [vmem:[%s4] sm:$0xff] %v1121
  %v1123 = vpack.c.bf16 %v407, %v404
  %v1124 = vpack.c.bf16 %v415, %v412
  %v1125 = vpack.c.bf16 %v423, %v420
  %v1126 = vpack.c.bf16 %v431, %v428
  %v1127 = vpack.c.bf16 %v439, %v436
  %v1128 = vpack.c.bf16 %v447, %v444
  %v1129 = vpack.c.bf16 %v455, %v452
  %v1130 = vpack.c.bf16 %v463, %v460
  %v1131 = vpack.c.bf16 %v471, %v468
  %v1132 = vpack.c.bf16 %v479, %v476
  %v1133 = vpack.c.bf16 %v487, %v484
  %v1134 = vpack.c.bf16 %v495, %v492
  %v1135 = vpack.c.bf16 %v503, %v500
  %v1136 = vpack.c.bf16 %v511, %v508
  %v1137 = vpack.c.bf16 %v519, %v516
  %v1138 = vpack.c.bf16 %v527, %v524
  %v1139 = vpack.c.bf16 %v535, %v532
  %v1140 = vpack.c.bf16 %v543, %v540
  %v1141 = vpack.c.bf16 %v551, %v548
  %v1142 = vpack.c.bf16 %v559, %v556
  %v1143 = vpack.c.bf16 %v567, %v564
  %v1144 = vpack.c.bf16 %v575, %v572
  %v1145 = vpack.c.bf16 %v583, %v580
  %v1146 = vpack.c.bf16 %v591, %v588
  %v1147 = vpack.c.bf16 %v599, %v596
  %v1148 = vpack.c.bf16 %v607, %v604
  %v1149 = vpack.c.bf16 %v615, %v612
  %v1150 = vpack.c.bf16 %v623, %v620
  %v1151 = vpack.c.bf16 %v631, %v628
  %v1152 = vpack.c.bf16 %v639, %v636
  %v1153 = vpack.c.bf16 %v647, %v644
  %v1154 = vpack.c.bf16 %v655, %v652
  %v1187 = vunpack.c.l.b16 %v1123
  %v1188 = vunpack.c.h.b16 %v1123
  %v1189 = vunpack.c.l.b16 %v1124
  %v1190 = vunpack.c.h.b16 %v1124
  %v1191 = vunpack.c.l.b16 %v1125
  %v1192 = vunpack.c.h.b16 %v1125
  %v1193 = vunpack.c.l.b16 %v1126
  %v1194 = vunpack.c.h.b16 %v1126
  %v1195 = vunpack.c.l.b16 %v1127
  %v1196 = vunpack.c.h.b16 %v1127
  %v1197 = vunpack.c.l.b16 %v1128
  %v1198 = vunpack.c.h.b16 %v1128
  %v1199 = vunpack.c.l.b16 %v1129
  %v1200 = vunpack.c.h.b16 %v1129
  %v1201 = vunpack.c.l.b16 %v1130
  %v1202 = vunpack.c.h.b16 %v1130
  %v1203 = vunpack.c.l.b16 %v1131
  %v1204 = vunpack.c.h.b16 %v1131
  %v1205 = vunpack.c.l.b16 %v1132
  %v1206 = vunpack.c.h.b16 %v1132
  %v1207 = vunpack.c.l.b16 %v1133
  %v1208 = vunpack.c.h.b16 %v1133
  %v1209 = vunpack.c.l.b16 %v1134
  %v1210 = vunpack.c.h.b16 %v1134
  %v1211 = vunpack.c.l.b16 %v1135
  %v1212 = vunpack.c.h.b16 %v1135
  %v1213 = vunpack.c.l.b16 %v1136
  %v1214 = vunpack.c.h.b16 %v1136
  %v1215 = vunpack.c.l.b16 %v1137
  %v1216 = vunpack.c.h.b16 %v1137
  %v1217 = vunpack.c.l.b16 %v1138
  %v1218 = vunpack.c.h.b16 %v1138
  %v1219 = vunpack.c.l.b16 %v1139
  %v1220 = vunpack.c.h.b16 %v1139
  %v1221 = vunpack.c.l.b16 %v1140
  %v1222 = vunpack.c.h.b16 %v1140
  %v1223 = vunpack.c.l.b16 %v1141
  %v1224 = vunpack.c.h.b16 %v1141
  %v1225 = vunpack.c.l.b16 %v1142
  %v1226 = vunpack.c.h.b16 %v1142
  %v1227 = vunpack.c.l.b16 %v1143
  %v1228 = vunpack.c.h.b16 %v1143
  %v1229 = vunpack.c.l.b16 %v1144
  %v1230 = vunpack.c.h.b16 %v1144
  %v1231 = vunpack.c.l.b16 %v1145
  %v1232 = vunpack.c.h.b16 %v1145
  %v1233 = vunpack.c.l.b16 %v1146
  %v1234 = vunpack.c.h.b16 %v1146
  %v1235 = vunpack.c.l.b16 %v1147
  %v1236 = vunpack.c.h.b16 %v1147
  %v1237 = vunpack.c.l.b16 %v1148
  %v1238 = vunpack.c.h.b16 %v1148
  %v1239 = vunpack.c.l.b16 %v1149
  %v1240 = vunpack.c.h.b16 %v1149
  %v1241 = vunpack.c.l.b16 %v1150
  %v1242 = vunpack.c.h.b16 %v1150
  %v1243 = vunpack.c.l.b16 %v1151
  %v1244 = vunpack.c.h.b16 %v1151
  %v1245 = vunpack.c.l.b16 %v1152
  %v1246 = vunpack.c.h.b16 %v1152
  %v1247 = vunpack.c.l.b16 %v1153
  %v1248 = vunpack.c.h.b16 %v1153
  %v1249 = vunpack.c.l.b16 %v1154
  %v1250 = vunpack.c.h.b16 %v1154
  %v1251 = vpack.c.b16 %v1187, %v1187
  %v1252 = vpack.c.b16 %v1188, %v1188
  %v1253 = vpack.c.b16 %v1189, %v1189
  %v1254 = vpack.c.b16 %v1190, %v1190
  %v1255 = vpack.c.b16 %v1191, %v1191
  %v1256 = vpack.c.b16 %v1192, %v1192
  %v1257 = vpack.c.b16 %v1193, %v1193
  %v1258 = vpack.c.b16 %v1194, %v1194
  %v1259 = vpack.c.b16 %v1195, %v1195
  %v1260 = vpack.c.b16 %v1196, %v1196
  %v1261 = vpack.c.b16 %v1197, %v1197
  %v1262 = vpack.c.b16 %v1198, %v1198
  %v1263 = vpack.c.b16 %v1199, %v1199
  %v1264 = vpack.c.b16 %v1200, %v1200
  %v1265 = vpack.c.b16 %v1201, %v1201
  %v1266 = vpack.c.b16 %v1202, %v1202
  %v1267 = vpack.c.b16 %v1203, %v1203
  %v1268 = vpack.c.b16 %v1204, %v1204
  %v1269 = vpack.c.b16 %v1205, %v1205
  %v1270 = vpack.c.b16 %v1206, %v1206
  %v1271 = vpack.c.b16 %v1207, %v1207
  %v1272 = vpack.c.b16 %v1208, %v1208
  %v1273 = vpack.c.b16 %v1209, %v1209
  %v1274 = vpack.c.b16 %v1210, %v1210
  %v1275 = vpack.c.b16 %v1211, %v1211
  %v1276 = vpack.c.b16 %v1212, %v1212
  %v1277 = vpack.c.b16 %v1213, %v1213
  %v1278 = vpack.c.b16 %v1214, %v1214
  %v1279 = vpack.c.b16 %v1215, %v1215
  %v1280 = vpack.c.b16 %v1216, %v1216
  %v1281 = vpack.c.b16 %v1217, %v1217
  %v1282 = vpack.c.b16 %v1218, %v1218
  %v1283 = vpack.c.b16 %v1219, %v1219
  %v1284 = vpack.c.b16 %v1220, %v1220
  %v1285 = vpack.c.b16 %v1221, %v1221
  %v1286 = vpack.c.b16 %v1222, %v1222
  %v1287 = vpack.c.b16 %v1223, %v1223
  %v1288 = vpack.c.b16 %v1224, %v1224
  %v1289 = vpack.c.b16 %v1225, %v1225
  %v1290 = vpack.c.b16 %v1226, %v1226
  %v1291 = vpack.c.b16 %v1227, %v1227
  %v1292 = vpack.c.b16 %v1228, %v1228
  %v1293 = vpack.c.b16 %v1229, %v1229
  %v1294 = vpack.c.b16 %v1230, %v1230
  %v1295 = vpack.c.b16 %v1231, %v1231
  %v1296 = vpack.c.b16 %v1232, %v1232
  %v1297 = vpack.c.b16 %v1233, %v1233
  %v1298 = vpack.c.b16 %v1234, %v1234
  %v1299 = vpack.c.b16 %v1235, %v1235
  %v1300 = vpack.c.b16 %v1236, %v1236
  %v1301 = vpack.c.b16 %v1237, %v1237
  %v1302 = vpack.c.b16 %v1238, %v1238
  %v1303 = vpack.c.b16 %v1239, %v1239
  %v1304 = vpack.c.b16 %v1240, %v1240
  %v1305 = vpack.c.b16 %v1241, %v1241
  %v1306 = vpack.c.b16 %v1242, %v1242
  %v1307 = vpack.c.b16 %v1243, %v1243
  %v1308 = vpack.c.b16 %v1244, %v1244
  %v1309 = vpack.c.b16 %v1245, %v1245
  %v1310 = vpack.c.b16 %v1246, %v1246
  %v1311 = vpack.c.b16 %v1247, %v1247
  %v1312 = vpack.c.b16 %v1248, %v1248
  %v1313 = vpack.c.b16 %v1249, %v1249
  %v1314 = vpack.c.b16 %v1250, %v1250
  %1379 = vst [vmem:[%s3] sm:$0xf] %v1251
  %1380 = vst [vmem:[%s3 + $0x4] sm:$0xf] %v1252
  %1381 = vst [vmem:[%s3 + $0x8] sm:$0xf] %v1253
  %1382 = vst [vmem:[%s3 + $0xc] sm:$0xf] %v1254
  %1383 = vst [vmem:[%s3 + $0x10] sm:$0xf] %v1255
  %1384 = vst [vmem:[%s3 + $0x14] sm:$0xf] %v1256
  %1385 = vst [vmem:[%s3 + $0x18] sm:$0xf] %v1257
  %1386 = vst [vmem:[%s3 + $0x1c] sm:$0xf] %v1258
  %1387 = vst [vmem:[%s3 + $0x20] sm:$0xf] %v1259
  %1388 = vst [vmem:[%s3 + $0x24] sm:$0xf] %v1260
  %1389 = vst [vmem:[%s3 + $0x28] sm:$0xf] %v1261
  %1390 = vst [vmem:[%s3 + $0x2c] sm:$0xf] %v1262
  %1391 = vst [vmem:[%s3 + $0x30] sm:$0xf] %v1263
  %1392 = vst [vmem:[%s3 + $0x34] sm:$0xf] %v1264
  %1393 = vst [vmem:[%s3 + $0x38] sm:$0xf] %v1265
  %1394 = vst [vmem:[%s3 + $0x3c] sm:$0xf] %v1266
  %1395 = vst [vmem:[%s3 + $0x40] sm:$0xf] %v1267
  %1396 = vst [vmem:[%s3 + $0x44] sm:$0xf] %v1268
  %1397 = vst [vmem:[%s3 + $0x48] sm:$0xf] %v1269
  %1398 = vst [vmem:[%s3 + $0x4c] sm:$0xf] %v1270
  %1399 = vst [vmem:[%s3 + $0x50] sm:$0xf] %v1271
  %1400 = vst [vmem:[%s3 + $0x54] sm:$0xf] %v1272
  %1401 = vst [vmem:[%s3 + $0x58] sm:$0xf] %v1273
  %1402 = vst [vmem:[%s3 + $0x5c] sm:$0xf] %v1274
  %1403 = vst [vmem:[%s3 + $0x60] sm:$0xf] %v1275
  %1404 = vst [vmem:[%s3 + $0x64] sm:$0xf] %v1276
  %1405 = vst [vmem:[%s3 + $0x68] sm:$0xf] %v1277
  %1406 = vst [vmem:[%s3 + $0x6c] sm:$0xf] %v1278
  %1407 = vst [vmem:[%s3 + $0x70] sm:$0xf] %v1279
  %1408 = vst [vmem:[%s3 + $0x74] sm:$0xf] %v1280
  %1409 = vst [vmem:[%s3 + $0x78] sm:$0xf] %v1281
  %1410 = vst [vmem:[%s3 + $0x7c] sm:$0xf] %v1282
  %1411 = vst [vmem:[%s3 + $0x80] sm:$0xf] %v1283
  %1412 = vst [vmem:[%s3 + $0x84] sm:$0xf] %v1284
  %1413 = vst [vmem:[%s3 + $0x88] sm:$0xf] %v1285
  %1414 = vst [vmem:[%s3 + $0x8c] sm:$0xf] %v1286
  %1415 = vst [vmem:[%s3 + $0x90] sm:$0xf] %v1287
  %1416 = vst [vmem:[%s3 + $0x94] sm:$0xf] %v1288
  %1417 = vst [vmem:[%s3 + $0x98] sm:$0xf] %v1289
  %1418 = vst [vmem:[%s3 + $0x9c] sm:$0xf] %v1290
  %1419 = vst [vmem:[%s3 + $0xa0] sm:$0xf] %v1291
  %1420 = vst [vmem:[%s3 + $0xa4] sm:$0xf] %v1292
  %1421 = vst [vmem:[%s3 + $0xa8] sm:$0xf] %v1293
  %1422 = vst [vmem:[%s3 + $0xac] sm:$0xf] %v1294
  %1423 = vst [vmem:[%s3 + $0xb0] sm:$0xf] %v1295
  %1424 = vst [vmem:[%s3 + $0xb4] sm:$0xf] %v1296
  %1425 = vst [vmem:[%s3 + $0xb8] sm:$0xf] %v1297
  %1426 = vst [vmem:[%s3 + $0xbc] sm:$0xf] %v1298
  %1427 = vst [vmem:[%s3 + $0xc0] sm:$0xf] %v1299
  %1428 = vst [vmem:[%s3 + $0xc4] sm:$0xf] %v1300
  %1429 = vst [vmem:[%s3 + $0xc8] sm:$0xf] %v1301
  %1430 = vst [vmem:[%s3 + $0xcc] sm:$0xf] %v1302
  %1431 = vst [vmem:[%s3 + $0xd0] sm:$0xf] %v1303
  %1432 = vst [vmem:[%s3 + $0xd4] sm:$0xf] %v1304
  %1433 = vst [vmem:[%s3 + $0xd8] sm:$0xf] %v1305
  %1434 = vst [vmem:[%s3 + $0xdc] sm:$0xf] %v1306
  %1435 = vst [vmem:[%s3 + $0xe0] sm:$0xf] %v1307
  %1436 = vst [vmem:[%s3 + $0xe4] sm:$0xf] %v1308
  %1437 = vst [vmem:[%s3 + $0xe8] sm:$0xf] %v1309
  %1438 = vst [vmem:[%s3 + $0xec] sm:$0xf] %v1310
  %1439 = vst [vmem:[%s3 + $0xf0] sm:$0xf] %v1311
  %1440 = vst [vmem:[%s3 + $0xf4] sm:$0xf] %v1312
  %1441 = vst [vmem:[%s3 + $0xf8] sm:$0xf] %v1313
  %1442 = vst [vmem:[%s3 + $0xfc] sm:$0xf] %v1314
  // Predicated region
  $region14: #{get_disparity_forward.2} parent=0 // pred_check
    _
  $region15: #{get_disparity_forward.2} parent=0 // pred_check_branch
    %1444 = sbr.rel (0) target = $region17
  $region16: #{get_disparity_forward.2} parent=0 // pred_region
    _
  $region17: #{get_disparity_forward.2} parent=0 // pred_fallthru
    _
  // Predicated region
  $region18: #{get_disparity_forward.2} parent=0 // pred_check
    _
  $region19: #{get_disparity_forward.2} parent=0 // pred_check_branch
    %1446 = sbr.rel (0) target = $region21
  $region20: #{get_disparity_forward.2} parent=0 // pred_region
    _
  $region21: #{get_disparity_forward.2} parent=0 // pred_fallthru
    _
  // Predicated region
  $region22: #{get_disparity_forward.2} parent=0 // pred_check
    _
  $region23: #{get_disparity_forward.2} parent=0 // pred_check_branch
    %1448 = sbr.rel (0) target = $region25
  $region24: #{get_disparity_forward.2} parent=0 // pred_region
    _
  $region25: #{get_disparity_forward.2} parent=0 // pred_fallthru
    _
  // Predicated region
  $region26: #{get_disparity_forward.2} parent=0 // pred_check
    _
  $region27: #{get_disparity_forward.2} parent=0 // pred_check_branch
    %1450 = sbr.rel (0) target = $region29
  $region28: #{get_disparity_forward.2} parent=0 // pred_region
    _
  $region29: #{get_disparity_forward.2} parent=0 // pred_fallthru
    _

</llo_original>
